<compile_context>
chip_gen: v5e
topology: v5e:2x2
jax: 0.10.0
libtpu: 0.0.40
codegen_flags: <defaults>
</compile_context>

<pallas_src>
import functools

import jax
import jax.numpy as jnp
from jax import lax
from jax.experimental import pallas as pl
from jax.experimental.pallas import tpu as pltpu


def _spatial_attention_kernel(w_ref, mask_ref, x_ref, o_ref,
                              sum_ref, max_ref, pad_a_ref, pad_m_ref,
                              *, H, W, K):
    # w_ref:    SMEM (2*K*K,) f32   [avg taps (pre-divided by C) ; max taps]
    # mask_ref: VMEM (K, H*W) f32   per-kw column-validity masks
    # x_ref:    VMEM (BB, CC, H*W)  one channel chunk of BB batch elements
    # o_ref:    VMEM (BB, H*W)      sigmoid(conv) output (unit dim squeezed)
    # sum_ref / max_ref:   VMEM (BB, H*W) f32 running channel sum / channel max
    # pad_a_ref / pad_m_ref: VMEM (BB, H*W + 2*(p*W+p)) f32 zero-padded maps
    BB = o_ref.shape[0]
    HW = H * W
    KK = K * K
    p = K // 2
    pad_flat = p * W + p

    c_idx = pl.program_id(1)
    nc = pl.num_programs(1)

    @pl.when(c_idx == 0)
    def _init():
        sum_ref[...] = jnp.zeros_like(sum_ref)
        max_ref[...] = jnp.full_like(max_ref, -jnp.inf)

    # Channel reduction of this chunk (accumulated across channel chunks).
    # Per-batch-row 2D reductions over the sublane (channel) axis.
    for bb in range(BB):
        xb = x_ref[bb].astype(jnp.float32)                       # (CC, HW)
        s = jnp.sum(xb, axis=0, keepdims=True)                   # (1, HW)
        m = jnp.max(xb, axis=0, keepdims=True)                   # (1, HW)
        row = pl.ds(bb, 1)
        sum_ref[row, :] = sum_ref[row, :] + s
        max_ref[row, :] = jnp.maximum(max_ref[row, :], m)

    @pl.when(c_idx == nc - 1)
    def _finalize():
        # Zero-padded flat maps: index t holds map[t - pad_flat]; the halo of
        # p*W + p zeros on each side realizes the vertical zero padding (and
        # any read past either end of the map).
        pad_a_ref[...] = jnp.zeros_like(pad_a_ref)
        pad_m_ref[...] = jnp.zeros_like(pad_m_ref)
        pad_a_ref[:, pl.ds(pad_flat, HW)] = sum_ref[...]
        pad_m_ref[:, pl.ds(pad_flat, HW)] = max_ref[...]

        mk = mask_ref[...]                                       # (K, HW)

        # 49-tap conv as static flat shifts: for output index m = i*W + j the
        # tap (kh, kw) reads padded index m + kh*W + kw.  Horizontal wrap into
        # the neighbouring row is killed by the per-kw column mask, which is
        # independent of kh and therefore applied once per kw (hoisted).
        acc = None
        for kw in range(K):
            part = None
            for kh in range(K):
                off = kh * W + kw
                wa = w_ref[kh * K + kw]                # avg tap (already * 1/C)
                wm = w_ref[KK + kh * K + kw]           # max tap
                t = (wa * pad_a_ref[:, pl.ds(off, HW)]
                     + wm * pad_m_ref[:, pl.ds(off, HW)])
                part = t if part is None else part + t
            if kw != p:                                # centre column: all-valid
                part = part * mk[kw:kw + 1]
            acc = part if acc is None else acc + part

        o_ref[...] = jax.nn.sigmoid(acc).astype(o_ref.dtype)


def _pick_batch_block(B):
    """Largest divisor of B that is <= 8 (batch rows live on sublanes)."""
    for bb in range(min(B, 8), 0, -1):
        if B % bb == 0:
            return bb
    return 1


def _pick_channel_chunk(C, BB, HW, budget_bytes=6 * 1024 * 1024):
    """Largest channel chunk whose double-buffered f32 block fits the budget."""
    max_cc = max(1, budget_bytes // (2 * 4 * BB * HW))
    if C <= max_cc:
        return C
    cc = 0
    for cand in range(8, max_cc + 1, 8):      # keep chunk divisible by 8
        if C % cand == 0:
            cc = cand
    return cc if cc > 0 else C                # fallback: whole C


def spatial_attention(x, w):
    """x: (B, C, H, W); w: (1, 2, K, K) conv weight (no bias). -> (B, 1, H, W)."""
    B, C, H, W = x.shape
    K = w.shape[-1]
    p = K // 2
    HW = H * W
    pad_flat = p * W + p
    PW = HW + 2 * pad_flat

    BB = _pick_batch_block(B)
    CC = _pick_channel_chunk(C, BB, HW)

    # Lane-dense view: flatten spatial (free reshape of a contiguous array).
    x_flat = x.reshape(B, C, HW)

    # Conv taps as SMEM scalars; fold 1/C into the avg-channel taps.
    w32 = w.astype(jnp.float32)
    w_flat = jnp.concatenate(
        [(w32[0, 0] / C).reshape(-1), w32[0, 1].reshape(-1)])   # (2*K*K,)

    # Per-kw column-validity masks for the flat-shift conv.
    col = jnp.arange(HW, dtype=jnp.int32) % W
    masks = jnp.stack(
        [((col >= -(kw - p)) & (col < W - (kw - p))).astype(jnp.float32)
         for kw in range(K)])                                   # (K, HW)

    kernel = functools.partial(_spatial_attention_kernel, H=H, W=W, K=K)
    out = pl.pallas_call(
        kernel,
        out_shape=jax.ShapeDtypeStruct((B, 1, HW), x.dtype),
        grid=(B // BB, C // CC),
        in_specs=[
            pl.BlockSpec(memory_space=pltpu.MemorySpace.SMEM),   # conv taps
            pl.BlockSpec((K, HW), lambda b, c: (0, 0)),          # column masks
            pl.BlockSpec((BB, CC, HW), lambda b, c: (b, c, 0)),  # x (unpadded)
        ],
        out_specs=pl.BlockSpec((BB, None, HW), lambda b, c: (b, 0, 0)),
        scratch_shapes=[
            pltpu.VMEM((BB, HW), jnp.float32),   # running channel sum
            pltpu.VMEM((BB, HW), jnp.float32),   # running channel max
            pltpu.VMEM((BB, PW), jnp.float32),   # zero-padded avg map
            pltpu.VMEM((BB, PW), jnp.float32),   # zero-padded max map
        ],
        compiler_params=pltpu.CompilerParams(
            dimension_semantics=("parallel", "arbitrary")),
    )(w_flat, masks, x_flat)
    return out.reshape(B, 1, H, W)


def _reference(x, w):
    """Pure-JAX reference mirroring the PyTorch forward."""
    avg = jnp.mean(x, axis=1, keepdims=True)
    mx = jnp.max(x, axis=1, keepdims=True)
    cat = jnp.concatenate([avg, mx], axis=1)                    # (B, 2, H, W)
    pad = w.shape[-1] // 2
    y = lax.conv_general_dilated(
        cat, w, window_strides=(1, 1), padding=[(pad, pad), (pad, pad)],
        dimension_numbers=("NCHW", "OIHW", "NCHW"))
    return jax.nn.sigmoid(y)


if __name__ == "__main__":
    key = jax.random.PRNGKey(0)
    kx, kw_key = jax.random.split(key)

    B, C, H, W, K = 2, 4, 16, 16, 7
    x = jax.random.normal(kx, (B, C, H, W), dtype=jnp.float32)
    # Deterministic conv1 weight: shape (out=1, in=2, K, K), no bias.
    conv_w = 0.1 * jax.random.normal(kw_key, (1, 2, K, K), dtype=jnp.float32)

    out = spatial_attention(x, conv_w)
    out = jax.block_until_ready(out)

    ref = _reference(x, conv_w)
    assert out.shape == (B, 1, H, W)
    assert jnp.allclose(out, ref, atol=1e-5, rtol=1e-5), (
        float(jnp.max(jnp.abs(out - ref))))

    print("KERNEL_OK")
</pallas_src>

<mosaic_0001>
module attributes {stable_mosaic.version = 11 : i64} {
  func.func @_spatial_attention_kernel(%arg0: i32, %arg1: i32, %arg2: memref<98xf32, #tpu.memory_space<smem>>, %arg3: memref<7x256xf32, #tpu.memory_space<vmem>>, %arg4: memref<2x4x256xf32, #tpu.memory_space<vmem>>, %arg5: memref<2x1x256xf32, #tpu.memory_space<vmem>>, %arg6: memref<2x256xf32, #tpu.memory_space<vmem>>, %arg7: memref<2x256xf32, #tpu.memory_space<vmem>>, %arg8: memref<2x358xf32, #tpu.memory_space<vmem>>, %arg9: memref<2x358xf32, #tpu.memory_space<vmem>>) attributes {dimension_semantics = [#tpu.dimension_semantics<parallel>, #tpu.dimension_semantics<arbitrary>], iteration_bounds = array<i64: 1, 1>, scalar_prefetch = 0 : i64, scratch_operands = 4 : i64, tpu.core_type = #tpu.core_type<tc>, window_params = [{transform_indices = @transform_0, window_bounds = array<i64: 98>}, {pipeline_mode = #tpu.pipeline_mode<synchronous>, transform_indices = @transform_1, window_bounds = array<i64: 7, 256>}, {transform_indices = @transform_2, window_bounds = array<i64: 2, 4, 256>}, {transform_indices = @transform_3, window_bounds = array<i64: 2, 1, 256>}]} {
    %c0_i32 = arith.constant 0 : i32
    %0 = arith.cmpi eq, %arg1, %c0_i32 : i32
    %1 = arith.extui %0 : i1 to i32
    %c0_i32_0 = arith.constant 0 : i32
    %2 = arith.cmpi ne, %1, %c0_i32_0 : i32
    scf.if %2 {
      %cst_26 = arith.constant 0.000000e+00 : f32
      %30 = vector.broadcast %cst_26 : f32 to vector<2x256xf32>
      %c0_27 = arith.constant 0 : index
      %c0_28 = arith.constant 0 : index
      %31 = vector.load %arg6[%c0_27, %c0_28] : memref<2x256xf32, #tpu.memory_space<vmem>>, vector<2x256xf32>
      tpu.vector_store %arg6[%c0_27, %c0_28], %30 {strides = array<i32>} : memref<2x256xf32, #tpu.memory_space<vmem>>, vector<2x256xf32>,
      %cst_29 = arith.constant 0xFF800000 : f32
      %32 = vector.broadcast %cst_29 : f32 to vector<2x256xf32>
      %c0_30 = arith.constant 0 : index
      %c0_31 = arith.constant 0 : index
      %33 = vector.load %arg7[%c0_30, %c0_31] : memref<2x256xf32, #tpu.memory_space<vmem>>, vector<2x256xf32>
      tpu.vector_store %arg7[%c0_30, %c0_31], %32 {strides = array<i32>} : memref<2x256xf32, #tpu.memory_space<vmem>>, vector<2x256xf32>,
    } else {
    }
    %c0 = arith.constant 0 : index
    %c0_1 = arith.constant 0 : index
    %c0_2 = arith.constant 0 : index
    %3 = vector.load %arg4[%c0, %c0_1, %c0_2] : memref<2x4x256xf32, #tpu.memory_space<vmem>>, vector<1x4x256xf32>
    %4 = vector.shape_cast %3 : vector<1x4x256xf32> to vector<4x256xf32>
    %cst = arith.constant dense<0.000000e+00> : vector<256xf32>
    %5 = vector.multi_reduction <add>, %4, %cst [0] : vector<4x256xf32> to vector<256xf32>
    %6 = vector.shape_cast %5 : vector<256xf32> to vector<1x256xf32>
    %cst_3 = arith.constant dense<0xFF800000> : vector<256xf32>
    %7 = vector.multi_reduction <maximumf>, %4, %cst_3 [0] : vector<4x256xf32> to vector<256xf32>
    %8 = vector.shape_cast %7 : vector<256xf32> to vector<1x256xf32>
    %c0_4 = arith.constant 0 : index
    %c0_5 = arith.constant 0 : index
    %9 = vector.load %arg6[%c0_4, %c0_5] : memref<2x256xf32, #tpu.memory_space<vmem>>, vector<1x256xf32>
    %10 = arith.addf %9, %6 : vector<1x256xf32>
    %c0_6 = arith.constant 0 : index
    %c0_7 = arith.constant 0 : index
    %11 = vector.load %arg6[%c0_6, %c0_7] : memref<2x256xf32, #tpu.memory_space<vmem>>, vector<1x256xf32>
    tpu.vector_store %arg6[%c0_6, %c0_7], %10 {strides = array<i32>} : memref<2x256xf32, #tpu.memory_space<vmem>>, vector<1x256xf32>,
    %c0_8 = arith.constant 0 : index
    %c0_9 = arith.constant 0 : index
    %12 = vector.load %arg7[%c0_8, %c0_9] : memref<2x256xf32, #tpu.memory_space<vmem>>, vector<1x256xf32>
    %13 = arith.maximumf %12, %8 : vector<1x256xf32>
    %c0_10 = arith.constant 0 : index
    %c0_11 = arith.constant 0 : index
    %14 = vector.load %arg7[%c0_10, %c0_11] : memref<2x256xf32, #tpu.memory_space<vmem>>, vector<1x256xf32>
    tpu.vector_store %arg7[%c0_10, %c0_11], %13 {strides = array<i32>} : memref<2x256xf32, #tpu.memory_space<vmem>>, vector<1x256xf32>,
    %c1 = arith.constant 1 : index
    %c0_12 = arith.constant 0 : index
    %c0_13 = arith.constant 0 : index
    %15 = vector.load %arg4[%c1, %c0_12, %c0_13] : memref<2x4x256xf32, #tpu.memory_space<vmem>>, vector<1x4x256xf32>
    %16 = vector.shape_cast %15 : vector<1x4x256xf32> to vector<4x256xf32>
    %cst_14 = arith.constant dense<0.000000e+00> : vector<256xf32>
    %17 = vector.multi_reduction <add>, %16, %cst_14 [0] : vector<4x256xf32> to vector<256xf32>
    %18 = vector.shape_cast %17 : vector<256xf32> to vector<1x256xf32>
    %cst_15 = arith.constant dense<0xFF800000> : vector<256xf32>
    %19 = vector.multi_reduction <maximumf>, %16, %cst_15 [0] : vector<4x256xf32> to vector<256xf32>
    %20 = vector.shape_cast %19 : vector<256xf32> to vector<1x256xf32>
    %c1_16 = arith.constant 1 : index
    %c0_17 = arith.constant 0 : index
    %21 = vector.load %arg6[%c1_16, %c0_17] : memref<2x256xf32, #tpu.memory_space<vmem>>, vector<1x256xf32>
    %22 = arith.addf %21, %18 : vector<1x256xf32>
    %c1_18 = arith.constant 1 : index
    %c0_19 = arith.constant 0 : index
    %23 = vector.load %arg6[%c1_18, %c0_19] : memref<2x256xf32, #tpu.memory_space<vmem>>, vector<1x256xf32>
    tpu.vector_store %arg6[%c1_18, %c0_19], %22 {strides = array<i32>} : memref<2x256xf32, #tpu.memory_space<vmem>>, vector<1x256xf32>,
    %c1_20 = arith.constant 1 : index
    %c0_21 = arith.constant 0 : index
    %24 = vector.load %arg7[%c1_20, %c0_21] : memref<2x256xf32, #tpu.memory_space<vmem>>, vector<1x256xf32>
    %25 = arith.maximumf %24, %20 : vector<1x256xf32>
    %c1_22 = arith.constant 1 : index
    %c0_23 = arith.constant 0 : index
    %26 = vector.load %arg7[%c1_22, %c0_23] : memref<2x256xf32, #tpu.memory_space<vmem>>, vector<1x256xf32>
    tpu.vector_store %arg7[%c1_22, %c0_23], %25 {strides = array<i32>} : memref<2x256xf32, #tpu.memory_space<vmem>>, vector<1x256xf32>,
    %c0_i32_24 = arith.constant 0 : i32
    %27 = arith.cmpi eq, %arg1, %c0_i32_24 : i32
    %28 = arith.extui %27 : i1 to i32
    %c0_i32_25 = arith.constant 0 : i32
    %29 = arith.cmpi ne, %28, %c0_i32_25 : i32
    scf.if %29 {
      %cst_26 = arith.constant 0.000000e+00 : f32
      %30 = vector.broadcast %cst_26 : f32 to vector<2x358xf32>
      %c0_27 = arith.constant 0 : index
      %c0_28 = arith.constant 0 : index
      %31 = vector.load %arg8[%c0_27, %c0_28] : memref<2x358xf32, #tpu.memory_space<vmem>>, vector<2x358xf32>
      tpu.vector_store %arg8[%c0_27, %c0_28], %30 {strides = array<i32>} : memref<2x358xf32, #tpu.memory_space<vmem>>, vector<2x358xf32>,
      %cst_29 = arith.constant 0.000000e+00 : f32
      %32 = vector.broadcast %cst_29 : f32 to vector<2x358xf32>
      %c0_30 = arith.constant 0 : index
      %c0_31 = arith.constant 0 : index
      %33 = vector.load %arg9[%c0_30, %c0_31] : memref<2x358xf32, #tpu.memory_space<vmem>>, vector<2x358xf32>
      tpu.vector_store %arg9[%c0_30, %c0_31], %32 {strides = array<i32>} : memref<2x358xf32, #tpu.memory_space<vmem>>, vector<2x358xf32>,
      %c0_32 = arith.constant 0 : index
      %c0_33 = arith.constant 0 : index
      %34 = vector.load %arg6[%c0_32, %c0_33] : memref<2x256xf32, #tpu.memory_space<vmem>>, vector<2x256xf32>
      %c0_34 = arith.constant 0 : index
      %c51 = arith.constant 51 : index
      %35 = vector.load %arg8[%c0_34, %c51] : memref<2x358xf32, #tpu.memory_space<vmem>>, vector<2x256xf32>
      tpu.vector_store %arg8[%c0_34, %c51], %34 {strides = array<i32>} : memref<2x358xf32, #tpu.memory_space<vmem>>, vector<2x256xf32>,
      %c0_35 = arith.constant 0 : index
      %c0_36 = arith.constant 0 : index
      %36 = vector.load %arg7[%c0_35, %c0_36] : memref<2x256xf32, #tpu.memory_space<vmem>>, vector<2x256xf32>
      %c0_37 = arith.constant 0 : index
      %c51_38 = arith.constant 51 : index
      %37 = vector.load %arg9[%c0_37, %c51_38] : memref<2x358xf32, #tpu.memory_space<vmem>>, vector<2x256xf32>
      tpu.vector_store %arg9[%c0_37, %c51_38], %36 {strides = array<i32>} : memref<2x358xf32, #tpu.memory_space<vmem>>, vector<2x256xf32>,
      %c0_39 = arith.constant 0 : index
      %c0_40 = arith.constant 0 : index
      %38 = vector.load %arg3[%c0_39, %c0_40] : memref<7x256xf32, #tpu.memory_space<vmem>>, vector<7x256xf32>
      %c0_41 = arith.constant 0 : index
      %39 = memref.load %arg2[%c0_41] : memref<98xf32, #tpu.memory_space<smem>>
      %c49 = arith.constant 49 : index
      %40 = memref.load %arg2[%c49] : memref<98xf32, #tpu.memory_space<smem>>
      %c0_42 = arith.constant 0 : index
      %c0_43 = arith.constant 0 : index
      %41 = vector.load %arg8[%c0_42, %c0_43] : memref<2x358xf32, #tpu.memory_space<vmem>>, vector<2x256xf32>
      %42 = vector.broadcast %39 : f32 to vector<2x256xf32>
      %43 = arith.mulf %42, %41 : vector<2x256xf32>
      %c0_44 = arith.constant 0 : index
      %c0_45 = arith.constant 0 : index
      %44 = vector.load %arg9[%c0_44, %c0_45] : memref<2x358xf32, #tpu.memory_space<vmem>>, vector<2x256xf32>
      %45 = vector.broadcast %40 : f32 to vector<2x256xf32>
      %46 = arith.mulf %45, %44 : vector<2x256xf32>
      %47 = arith.addf %43, %46 : vector<2x256xf32>
      %c7 = arith.constant 7 : index
      %48 = memref.load %arg2[%c7] : memref<98xf32, #tpu.memory_space<smem>>
      %c56 = arith.constant 56 : index
      %49 = memref.load %arg2[%c56] : memref<98xf32, #tpu.memory_space<smem>>
      %c0_46 = arith.constant 0 : index
      %c16 = arith.constant 16 : index
      %50 = vector.load %arg8[%c0_46, %c16] : memref<2x358xf32, #tpu.memory_space<vmem>>, vector<2x256xf32>
      %51 = vector.broadcast %48 : f32 to vector<2x256xf32>
      %52 = arith.mulf %51, %50 : vector<2x256xf32>
      %c0_47 = arith.constant 0 : index
      %c16_48 = arith.constant 16 : index
      %53 = vector.load %arg9[%c0_47, %c16_48] : memref<2x358xf32, #tpu.memory_space<vmem>>, vector<2x256xf32>
      %54 = vector.broadcast %49 : f32 to vector<2x256xf32>
      %55 = arith.mulf %54, %53 : vector<2x256xf32>
      %56 = arith.addf %52, %55 : vector<2x256xf32>
      %57 = arith.addf %47, %56 : vector<2x256xf32>
      %c14 = arith.constant 14 : index
      %58 = memref.load %arg2[%c14] : memref<98xf32, #tpu.memory_space<smem>>
      %c63 = arith.constant 63 : index
      %59 = memref.load %arg2[%c63] : memref<98xf32, #tpu.memory_space<smem>>
      %c0_49 = arith.constant 0 : index
      %c32 = arith.constant 32 : index
      %60 = vector.load %arg8[%c0_49, %c32] : memref<2x358xf32, #tpu.memory_space<vmem>>, vector<2x256xf32>
      %61 = vector.broadcast %58 : f32 to vector<2x256xf32>
      %62 = arith.mulf %61, %60 : vector<2x256xf32>
      %c0_50 = arith.constant 0 : index
      %c32_51 = arith.constant 32 : index
      %63 = vector.load %arg9[%c0_50, %c32_51] : memref<2x358xf32, #tpu.memory_space<vmem>>, vector<2x256xf32>
      %64 = vector.broadcast %59 : f32 to vector<2x256xf32>
      %65 = arith.mulf %64, %63 : vector<2x256xf32>
      %66 = arith.addf %62, %65 : vector<2x256xf32>
      %67 = arith.addf %57, %66 : vector<2x256xf32>
      %c21 = arith.constant 21 : index
      %68 = memref.load %arg2[%c21] : memref<98xf32, #tpu.memory_space<smem>>
      %c70 = arith.constant 70 : index
      %69 = memref.load %arg2[%c70] : memref<98xf32, #tpu.memory_space<smem>>
      %c0_52 = arith.constant 0 : index
      %c48 = arith.constant 48 : index
      %70 = vector.load %arg8[%c0_52, %c48] : memref<2x358xf32, #tpu.memory_space<vmem>>, vector<2x256xf32>
      %71 = vector.broadcast %68 : f32 to vector<2x256xf32>
      %72 = arith.mulf %71, %70 : vector<2x256xf32>
      %c0_53 = arith.constant 0 : index
      %c48_54 = arith.constant 48 : index
      %73 = vector.load %arg9[%c0_53, %c48_54] : memref<2x358xf32, #tpu.memory_space<vmem>>, vector<2x256xf32>
      %74 = vector.broadcast %69 : f32 to vector<2x256xf32>
      %75 = arith.mulf %74, %73 : vector<2x256xf32>
      %76 = arith.addf %72, %75 : vector<2x256xf32>
      %77 = arith.addf %67, %76 : vector<2x256xf32>
      %c28 = arith.constant 28 : index
      %78 = memref.load %arg2[%c28] : memref<98xf32, #tpu.memory_space<smem>>
      %c77 = arith.constant 77 : index
      %79 = memref.load %arg2[%c77] : memref<98xf32, #tpu.memory_space<smem>>
      %c0_55 = arith.constant 0 : index
      %c64 = arith.constant 64 : index
      %80 = vector.load %arg8[%c0_55, %c64] : memref<2x358xf32, #tpu.memory_space<vmem>>, vector<2x256xf32>
      %81 = vector.broadcast %78 : f32 to vector<2x256xf32>
      %82 = arith.mulf %81, %80 : vector<2x256xf32>
      %c0_56 = arith.constant 0 : index
      %c64_57 = arith.constant 64 : index
      %83 = vector.load %arg9[%c0_56, %c64_57] : memref<2x358xf32, #tpu.memory_space<vmem>>, vector<2x256xf32>
      %84 = vector.broadcast %79 : f32 to vector<2x256xf32>
      %85 = arith.mulf %84, %83 : vector<2x256xf32>
      %86 = arith.addf %82, %85 : vector<2x256xf32>
      %87 = arith.addf %77, %86 : vector<2x256xf32>
      %c35 = arith.constant 35 : index
      %88 = memref.load %arg2[%c35] : memref<98xf32, #tpu.memory_space<smem>>
      %c84 = arith.constant 84 : index
      %89 = memref.load %arg2[%c84] : memref<98xf32, #tpu.memory_space<smem>>
      %c0_58 = arith.constant 0 : index
      %c80 = arith.constant 80 : index
      %90 = vector.load %arg8[%c0_58, %c80] : memref<2x358xf32, #tpu.memory_space<vmem>>, vector<2x256xf32>
      %91 = vector.broadcast %88 : f32 to vector<2x256xf32>
      %92 = arith.mulf %91, %90 : vector<2x256xf32>
      %c0_59 = arith.constant 0 : index
      %c80_60 = arith.constant 80 : index
      %93 = vector.load %arg9[%c0_59, %c80_60] : memref<2x358xf32, #tpu.memory_space<vmem>>, vector<2x256xf32>
      %94 = vector.broadcast %89 : f32 to vector<2x256xf32>
      %95 = arith.mulf %94, %93 : vector<2x256xf32>
      %96 = arith.addf %92, %95 : vector<2x256xf32>
      %97 = arith.addf %87, %96 : vector<2x256xf32>
      %c42 = arith.constant 42 : index
      %98 = memref.load %arg2[%c42] : memref<98xf32, #tpu.memory_space<smem>>
      %c91 = arith.constant 91 : index
      %99 = memref.load %arg2[%c91] : memref<98xf32, #tpu.memory_space<smem>>
      %c0_61 = arith.constant 0 : index
      %c96 = arith.constant 96 : index
      %100 = vector.load %arg8[%c0_61, %c96] : memref<2x358xf32, #tpu.memory_space<vmem>>, vector<2x256xf32>
      %101 = vector.broadcast %98 : f32 to vector<2x256xf32>
      %102 = arith.mulf %101, %100 : vector<2x256xf32>
      %c0_62 = arith.constant 0 : index
      %c96_63 = arith.constant 96 : index
      %103 = vector.load %arg9[%c0_62, %c96_63] : memref<2x358xf32, #tpu.memory_space<vmem>>, vector<2x256xf32>
      %104 = vector.broadcast %99 : f32 to vector<2x256xf32>
      %105 = arith.mulf %104, %103 : vector<2x256xf32>
      %106 = arith.addf %102, %105 : vector<2x256xf32>
      %107 = arith.addf %97, %106 : vector<2x256xf32>
      %108 = vector.extract_strided_slice %38 {offsets = [0, 0], sizes = [1, 256], strides = [1, 1]} : vector<7x256xf32> to vector<1x256xf32>
      %109 = vector.broadcast %108 : vector<1x256xf32> to vector<2x256xf32>
      %110 = arith.mulf %107, %109 : vector<2x256xf32>
      %c1_64 = arith.constant 1 : index
      %111 = memref.load %arg2[%c1_64] : memref<98xf32, #tpu.memory_space<smem>>
      %c50 = arith.constant 50 : index
      %112 = memref.load %arg2[%c50] : memref<98xf32, #tpu.memory_space<smem>>
      %c0_65 = arith.constant 0 : index
      %c1_66 = arith.constant 1 : index
      %113 = vector.load %arg8[%c0_65, %c1_66] : memref<2x358xf32, #tpu.memory_space<vmem>>, vector<2x256xf32>
      %114 = vector.broadcast %111 : f32 to vector<2x256xf32>
      %115 = arith.mulf %114, %113 : vector<2x256xf32>
      %c0_67 = arith.constant 0 : index
      %c1_68 = arith.constant 1 : index
      %116 = vector.load %arg9[%c0_67, %c1_68] : memref<2x358xf32, #tpu.memory_space<vmem>>, vector<2x256xf32>
      %117 = vector.broadcast %112 : f32 to vector<2x256xf32>
      %118 = arith.mulf %117, %116 : vector<2x256xf32>
      %119 = arith.addf %115, %118 : vector<2x256xf32>
      %c8 = arith.constant 8 : index
      %120 = memref.load %arg2[%c8] : memref<98xf32, #tpu.memory_space<smem>>
      %c57 = arith.constant 57 : index
      %121 = memref.load %arg2[%c57] : memref<98xf32, #tpu.memory_space<smem>>
      %c0_69 = arith.constant 0 : index
      %c17 = arith.constant 17 : index
      %122 = vector.load %arg8[%c0_69, %c17] : memref<2x358xf32, #tpu.memory_space<vmem>>, vector<2x256xf32>
      %123 = vector.broadcast %120 : f32 to vector<2x256xf32>
      %124 = arith.mulf %123, %122 : vector<2x256xf32>
      %c0_70 = arith.constant 0 : index
      %c17_71 = arith.constant 17 : index
      %125 = vector.load %arg9[%c0_70, %c17_71] : memref<2x358xf32, #tpu.memory_space<vmem>>, vector<2x256xf32>
      %126 = vector.broadcast %121 : f32 to vector<2x256xf32>
      %127 = arith.mulf %126, %125 : vector<2x256xf32>
      %128 = arith.addf %124, %127 : vector<2x256xf32>
      %129 = arith.addf %119, %128 : vector<2x256xf32>
      %c15 = arith.constant 15 : index
      %130 = memref.load %arg2[%c15] : memref<98xf32, #tpu.memory_space<smem>>
      %c64_72 = arith.constant 64 : index
      %131 = memref.load %arg2[%c64_72] : memref<98xf32, #tpu.memory_space<smem>>
      %c0_73 = arith.constant 0 : index
      %c33 = arith.constant 33 : index
      %132 = vector.load %arg8[%c0_73, %c33] : memref<2x358xf32, #tpu.memory_space<vmem>>, vector<2x256xf32>
      %133 = vector.broadcast %130 : f32 to vector<2x256xf32>
      %134 = arith.mulf %133, %132 : vector<2x256xf32>
      %c0_74 = arith.constant 0 : index
      %c33_75 = arith.constant 33 : index
      %135 = vector.load %arg9[%c0_74, %c33_75] : memref<2x358xf32, #tpu.memory_space<vmem>>, vector<2x256xf32>
      %136 = vector.broadcast %131 : f32 to vector<2x256xf32>
      %137 = arith.mulf %136, %135 : vector<2x256xf32>
      %138 = arith.addf %134, %137 : vector<2x256xf32>
      %139 = arith.addf %129, %138 : vector<2x256xf32>
      %c22 = arith.constant 22 : index
      %140 = memref.load %arg2[%c22] : memref<98xf32, #tpu.memory_space<smem>>
      %c71 = arith.constant 71 : index
      %141 = memref.load %arg2[%c71] : memref<98xf32, #tpu.memory_space<smem>>
      %c0_76 = arith.constant 0 : index
      %c49_77 = arith.constant 49 : index
      %142 = vector.load %arg8[%c0_76, %c49_77] : memref<2x358xf32, #tpu.memory_space<vmem>>, vector<2x256xf32>
      %143 = vector.broadcast %140 : f32 to vector<2x256xf32>
      %144 = arith.mulf %143, %142 : vector<2x256xf32>
      %c0_78 = arith.constant 0 : index
      %c49_79 = arith.constant 49 : index
      %145 = vector.load %arg9[%c0_78, %c49_79] : memref<2x358xf32, #tpu.memory_space<vmem>>, vector<2x256xf32>
      %146 = vector.broadcast %141 : f32 to vector<2x256xf32>
      %147 = arith.mulf %146, %145 : vector<2x256xf32>
      %148 = arith.addf %144, %147 : vector<2x256xf32>
      %149 = arith.addf %139, %148 : vector<2x256xf32>
      %c29 = arith.constant 29 : index
      %150 = memref.load %arg2[%c29] : memref<98xf32, #tpu.memory_space<smem>>
      %c78 = arith.constant 78 : index
      %151 = memref.load %arg2[%c78] : memref<98xf32, #tpu.memory_space<smem>>
      %c0_80 = arith.constant 0 : index
      %c65 = arith.constant 65 : index
      %152 = vector.load %arg8[%c0_80, %c65] : memref<2x358xf32, #tpu.memory_space<vmem>>, vector<2x256xf32>
      %153 = vector.broadcast %150 : f32 to vector<2x256xf32>
      %154 = arith.mulf %153, %152 : vector<2x256xf32>
      %c0_81 = arith.constant 0 : index
      %c65_82 = arith.constant 65 : index
      %155 = vector.load %arg9[%c0_81, %c65_82] : memref<2x358xf32, #tpu.memory_space<vmem>>, vector<2x256xf32>
      %156 = vector.broadcast %151 : f32 to vector<2x256xf32>
      %157 = arith.mulf %156, %155 : vector<2x256xf32>
      %158 = arith.addf %154, %157 : vector<2x256xf32>
      %159 = arith.addf %149, %158 : vector<2x256xf32>
      %c36 = arith.constant 36 : index
      %160 = memref.load %arg2[%c36] : memref<98xf32, #tpu.memory_space<smem>>
      %c85 = arith.constant 85 : index
      %161 = memref.load %arg2[%c85] : memref<98xf32, #tpu.memory_space<smem>>
      %c0_83 = arith.constant 0 : index
      %c81 = arith.constant 81 : index
      %162 = vector.load %arg8[%c0_83, %c81] : memref<2x358xf32, #tpu.memory_space<vmem>>, vector<2x256xf32>
      %163 = vector.broadcast %160 : f32 to vector<2x256xf32>
      %164 = arith.mulf %163, %162 : vector<2x256xf32>
      %c0_84 = arith.constant 0 : index
      %c81_85 = arith.constant 81 : index
      %165 = vector.load %arg9[%c0_84, %c81_85] : memref<2x358xf32, #tpu.memory_space<vmem>>, vector<2x256xf32>
      %166 = vector.broadcast %161 : f32 to vector<2x256xf32>
      %167 = arith.mulf %166, %165 : vector<2x256xf32>
      %168 = arith.addf %164, %167 : vector<2x256xf32>
      %169 = arith.addf %159, %168 : vector<2x256xf32>
      %c43 = arith.constant 43 : index
      %170 = memref.load %arg2[%c43] : memref<98xf32, #tpu.memory_space<smem>>
      %c92 = arith.constant 92 : index
      %171 = memref.load %arg2[%c92] : memref<98xf32, #tpu.memory_space<smem>>
      %c0_86 = arith.constant 0 : index
      %c97 = arith.constant 97 : index
      %172 = vector.load %arg8[%c0_86, %c97] : memref<2x358xf32, #tpu.memory_space<vmem>>, vector<2x256xf32>
      %173 = vector.broadcast %170 : f32 to vector<2x256xf32>
      %174 = arith.mulf %173, %172 : vector<2x256xf32>
      %c0_87 = arith.constant 0 : index
      %c97_88 = arith.constant 97 : index
      %175 = vector.load %arg9[%c0_87, %c97_88] : memref<2x358xf32, #tpu.memory_space<vmem>>, vector<2x256xf32>
      %176 = vector.broadcast %171 : f32 to vector<2x256xf32>
      %177 = arith.mulf %176, %175 : vector<2x256xf32>
      %178 = arith.addf %174, %177 : vector<2x256xf32>
      %179 = arith.addf %169, %178 : vector<2x256xf32>
      %180 = vector.extract_strided_slice %38 {offsets = [1, 0], sizes = [1, 256], strides = [1, 1]} : vector<7x256xf32> to vector<1x256xf32>
      %181 = vector.broadcast %180 : vector<1x256xf32> to vector<2x256xf32>
      %182 = arith.mulf %179, %181 : vector<2x256xf32>
      %183 = arith.addf %110, %182 : vector<2x256xf32>
      %c2 = arith.constant 2 : index
      %184 = memref.load %arg2[%c2] : memref<98xf32, #tpu.memory_space<smem>>
      %c51_89 = arith.constant 51 : index
      %185 = memref.load %arg2[%c51_89] : memref<98xf32, #tpu.memory_space<smem>>
      %c0_90 = arith.constant 0 : index
      %c2_91 = arith.constant 2 : index
      %186 = vector.load %arg8[%c0_90, %c2_91] : memref<2x358xf32, #tpu.memory_space<vmem>>, vector<2x256xf32>
      %187 = vector.broadcast %184 : f32 to vector<2x256xf32>
      %188 = arith.mulf %187, %186 : vector<2x256xf32>
      %c0_92 = arith.constant 0 : index
      %c2_93 = arith.constant 2 : index
      %189 = vector.load %arg9[%c0_92, %c2_93] : memref<2x358xf32, #tpu.memory_space<vmem>>, vector<2x256xf32>
      %190 = vector.broadcast %185 : f32 to vector<2x256xf32>
      %191 = arith.mulf %190, %189 : vector<2x256xf32>
      %192 = arith.addf %188, %191 : vector<2x256xf32>
      %c9 = arith.constant 9 : index
      %193 = memref.load %arg2[%c9] : memref<98xf32, #tpu.memory_space<smem>>
      %c58 = arith.constant 58 : index
      %194 = memref.load %arg2[%c58] : memref<98xf32, #tpu.memory_space<smem>>
      %c0_94 = arith.constant 0 : index
      %c18 = arith.constant 18 : index
      %195 = vector.load %arg8[%c0_94, %c18] : memref<2x358xf32, #tpu.memory_space<vmem>>, vector<2x256xf32>
      %196 = vector.broadcast %193 : f32 to vector<2x256xf32>
      %197 = arith.mulf %196, %195 : vector<2x256xf32>
      %c0_95 = arith.constant 0 : index
      %c18_96 = arith.constant 18 : index
      %198 = vector.load %arg9[%c0_95, %c18_96] : memref<2x358xf32, #tpu.memory_space<vmem>>, vector<2x256xf32>
      %199 = vector.broadcast %194 : f32 to vector<2x256xf32>
      %200 = arith.mulf %199, %198 : vector<2x256xf32>
      %201 = arith.addf %197, %200 : vector<2x256xf32>
      %202 = arith.addf %192, %201 : vector<2x256xf32>
      %c16_97 = arith.constant 16 : index
      %203 = memref.load %arg2[%c16_97] : memref<98xf32, #tpu.memory_space<smem>>
      %c65_98 = arith.constant 65 : index
      %204 = memref.load %arg2[%c65_98] : memref<98xf32, #tpu.memory_space<smem>>
      %c0_99 = arith.constant 0 : index
      %c34 = arith.constant 34 : index
      %205 = vector.load %arg8[%c0_99, %c34] : memref<2x358xf32, #tpu.memory_space<vmem>>, vector<2x256xf32>
      %206 = vector.broadcast %203 : f32 to vector<2x256xf32>
      %207 = arith.mulf %206, %205 : vector<2x256xf32>
      %c0_100 = arith.constant 0 : index
      %c34_101 = arith.constant 34 : index
      %208 = vector.load %arg9[%c0_100, %c34_101] : memref<2x358xf32, #tpu.memory_space<vmem>>, vector<2x256xf32>
      %209 = vector.broadcast %204 : f32 to vector<2x256xf32>
      %210 = arith.mulf %209, %208 : vector<2x256xf32>
      %211 = arith.addf %207, %210 : vector<2x256xf32>
      %212 = arith.addf %202, %211 : vector<2x256xf32>
      %c23 = arith.constant 23 : index
      %213 = memref.load %arg2[%c23] : memref<98xf32, #tpu.memory_space<smem>>
      %c72 = arith.constant 72 : index
      %214 = memref.load %arg2[%c72] : memref<98xf32, #tpu.memory_space<smem>>
      %c0_102 = arith.constant 0 : index
      %c50_103 = arith.constant 50 : index
      %215 = vector.load %arg8[%c0_102, %c50_103] : memref<2x358xf32, #tpu.memory_space<vmem>>, vector<2x256xf32>
      %216 = vector.broadcast %213 : f32 to vector<2x256xf32>
      %217 = arith.mulf %216, %215 : vector<2x256xf32>
      %c0_104 = arith.constant 0 : index
      %c50_105 = arith.constant 50 : index
      %218 = vector.load %arg9[%c0_104, %c50_105] : memref<2x358xf32, #tpu.memory_space<vmem>>, vector<2x256xf32>
      %219 = vector.broadcast %214 : f32 to vector<2x256xf32>
      %220 = arith.mulf %219, %218 : vector<2x256xf32>
      %221 = arith.addf %217, %220 : vector<2x256xf32>
      %222 = arith.addf %212, %221 : vector<2x256xf32>
      %c30 = arith.constant 30 : index
      %223 = memref.load %arg2[%c30] : memref<98xf32, #tpu.memory_space<smem>>
      %c79 = arith.constant 79 : index
      %224 = memref.load %arg2[%c79] : memref<98xf32, #tpu.memory_space<smem>>
      %c0_106 = arith.constant 0 : index
      %c66 = arith.constant 66 : index
      %225 = vector.load %arg8[%c0_106, %c66] : memref<2x358xf32, #tpu.memory_space<vmem>>, vector<2x256xf32>
      %226 = vector.broadcast %223 : f32 to vector<2x256xf32>
      %227 = arith.mulf %226, %225 : vector<2x256xf32>
      %c0_107 = arith.constant 0 : index
      %c66_108 = arith.constant 66 : index
      %228 = vector.load %arg9[%c0_107, %c66_108] : memref<2x358xf32, #tpu.memory_space<vmem>>, vector<2x256xf32>
      %229 = vector.broadcast %224 : f32 to vector<2x256xf32>
      %230 = arith.mulf %229, %228 : vector<2x256xf32>
      %231 = arith.addf %227, %230 : vector<2x256xf32>
      %232 = arith.addf %222, %231 : vector<2x256xf32>
      %c37 = arith.constant 37 : index
      %233 = memref.load %arg2[%c37] : memref<98xf32, #tpu.memory_space<smem>>
      %c86 = arith.constant 86 : index
      %234 = memref.load %arg2[%c86] : memref<98xf32, #tpu.memory_space<smem>>
      %c0_109 = arith.constant 0 : index
      %c82 = arith.constant 82 : index
      %235 = vector.load %arg8[%c0_109, %c82] : memref<2x358xf32, #tpu.memory_space<vmem>>, vector<2x256xf32>
      %236 = vector.broadcast %233 : f32 to vector<2x256xf32>
      %237 = arith.mulf %236, %235 : vector<2x256xf32>
      %c0_110 = arith.constant 0 : index
      %c82_111 = arith.constant 82 : index
      %238 = vector.load %arg9[%c0_110, %c82_111] : memref<2x358xf32, #tpu.memory_space<vmem>>, vector<2x256xf32>
      %239 = vector.broadcast %234 : f32 to vector<2x256xf32>
      %240 = arith.mulf %239, %238 : vector<2x256xf32>
      %241 = arith.addf %237, %240 : vector<2x256xf32>
      %242 = arith.addf %232, %241 : vector<2x256xf32>
      %c44 = arith.constant 44 : index
      %243 = memref.load %arg2[%c44] : memref<98xf32, #tpu.memory_space<smem>>
      %c93 = arith.constant 93 : index
      %244 = memref.load %arg2[%c93] : memref<98xf32, #tpu.memory_space<smem>>
      %c0_112 = arith.constant 0 : index
      %c98 = arith.constant 98 : index
      %245 = vector.load %arg8[%c0_112, %c98] : memref<2x358xf32, #tpu.memory_space<vmem>>, vector<2x256xf32>
      %246 = vector.broadcast %243 : f32 to vector<2x256xf32>
      %247 = arith.mulf %246, %245 : vector<2x256xf32>
      %c0_113 = arith.constant 0 : index
      %c98_114 = arith.constant 98 : index
      %248 = vector.load %arg9[%c0_113, %c98_114] : memref<2x358xf32, #tpu.memory_space<vmem>>, vector<2x256xf32>
      %249 = vector.broadcast %244 : f32 to vector<2x256xf32>
      %250 = arith.mulf %249, %248 : vector<2x256xf32>
      %251 = arith.addf %247, %250 : vector<2x256xf32>
      %252 = arith.addf %242, %251 : vector<2x256xf32>
      %253 = vector.extract_strided_slice %38 {offsets = [2, 0], sizes = [1, 256], strides = [1, 1]} : vector<7x256xf32> to vector<1x256xf32>
      %254 = vector.broadcast %253 : vector<1x256xf32> to vector<2x256xf32>
      %255 = arith.mulf %252, %254 : vector<2x256xf32>
      %256 = arith.addf %183, %255 : vector<2x256xf32>
      %c3 = arith.constant 3 : index
      %257 = memref.load %arg2[%c3] : memref<98xf32, #tpu.memory_space<smem>>
      %c52 = arith.constant 52 : index
      %258 = memref.load %arg2[%c52] : memref<98xf32, #tpu.memory_space<smem>>
      %c0_115 = arith.constant 0 : index
      %c3_116 = arith.constant 3 : index
      %259 = vector.load %arg8[%c0_115, %c3_116] : memref<2x358xf32, #tpu.memory_space<vmem>>, vector<2x256xf32>
      %260 = vector.broadcast %257 : f32 to vector<2x256xf32>
      %261 = arith.mulf %260, %259 : vector<2x256xf32>
      %c0_117 = arith.constant 0 : index
      %c3_118 = arith.constant 3 : index
      %262 = vector.load %arg9[%c0_117, %c3_118] : memref<2x358xf32, #tpu.memory_space<vmem>>, vector<2x256xf32>
      %263 = vector.broadcast %258 : f32 to vector<2x256xf32>
      %264 = arith.mulf %263, %262 : vector<2x256xf32>
      %265 = arith.addf %261, %264 : vector<2x256xf32>
      %c10 = arith.constant 10 : index
      %266 = memref.load %arg2[%c10] : memref<98xf32, #tpu.memory_space<smem>>
      %c59 = arith.constant 59 : index
      %267 = memref.load %arg2[%c59] : memref<98xf32, #tpu.memory_space<smem>>
      %c0_119 = arith.constant 0 : index
      %c19 = arith.constant 19 : index
      %268 = vector.load %arg8[%c0_119, %c19] : memref<2x358xf32, #tpu.memory_space<vmem>>, vector<2x256xf32>
      %269 = vector.broadcast %266 : f32 to vector<2x256xf32>
      %270 = arith.mulf %269, %268 : vector<2x256xf32>
      %c0_120 = arith.constant 0 : index
      %c19_121 = arith.constant 19 : index
      %271 = vector.load %arg9[%c0_120, %c19_121] : memref<2x358xf32, #tpu.memory_space<vmem>>, vector<2x256xf32>
      %272 = vector.broadcast %267 : f32 to vector<2x256xf32>
      %273 = arith.mulf %272, %271 : vector<2x256xf32>
      %274 = arith.addf %270, %273 : vector<2x256xf32>
      %275 = arith.addf %265, %274 : vector<2x256xf32>
      %c17_122 = arith.constant 17 : index
      %276 = memref.load %arg2[%c17_122] : memref<98xf32, #tpu.memory_space<smem>>
      %c66_123 = arith.constant 66 : index
      %277 = memref.load %arg2[%c66_123] : memref<98xf32, #tpu.memory_space<smem>>
      %c0_124 = arith.constant 0 : index
      %c35_125 = arith.constant 35 : index
      %278 = vector.load %arg8[%c0_124, %c35_125] : memref<2x358xf32, #tpu.memory_space<vmem>>, vector<2x256xf32>
      %279 = vector.broadcast %276 : f32 to vector<2x256xf32>
      %280 = arith.mulf %279, %278 : vector<2x256xf32>
      %c0_126 = arith.constant 0 : index
      %c35_127 = arith.constant 35 : index
      %281 = vector.load %arg9[%c0_126, %c35_127] : memref<2x358xf32, #tpu.memory_space<vmem>>, vector<2x256xf32>
      %282 = vector.broadcast %277 : f32 to vector<2x256xf32>
      %283 = arith.mulf %282, %281 : vector<2x256xf32>
      %284 = arith.addf %280, %283 : vector<2x256xf32>
      %285 = arith.addf %275, %284 : vector<2x256xf32>
      %c24 = arith.constant 24 : index
      %286 = memref.load %arg2[%c24] : memref<98xf32, #tpu.memory_space<smem>>
      %c73 = arith.constant 73 : index
      %287 = memref.load %arg2[%c73] : memref<98xf32, #tpu.memory_space<smem>>
      %c0_128 = arith.constant 0 : index
      %c51_129 = arith.constant 51 : index
      %288 = vector.load %arg8[%c0_128, %c51_129] : memref<2x358xf32, #tpu.memory_space<vmem>>, vector<2x256xf32>
      %289 = vector.broadcast %286 : f32 to vector<2x256xf32>
      %290 = arith.mulf %289, %288 : vector<2x256xf32>
      %c0_130 = arith.constant 0 : index
      %c51_131 = arith.constant 51 : index
      %291 = vector.load %arg9[%c0_130, %c51_131] : memref<2x358xf32, #tpu.memory_space<vmem>>, vector<2x256xf32>
      %292 = vector.broadcast %287 : f32 to vector<2x256xf32>
      %293 = arith.mulf %292, %291 : vector<2x256xf32>
      %294 = arith.addf %290, %293 : vector<2x256xf32>
      %295 = arith.addf %285, %294 : vector<2x256xf32>
      %c31 = arith.constant 31 : index
      %296 = memref.load %arg2[%c31] : memref<98xf32, #tpu.memory_space<smem>>
      %c80_132 = arith.constant 80 : index
      %297 = memref.load %arg2[%c80_132] : memref<98xf32, #tpu.memory_space<smem>>
      %c0_133 = arith.constant 0 : index
      %c67 = arith.constant 67 : index
      %298 = vector.load %arg8[%c0_133, %c67] : memref<2x358xf32, #tpu.memory_space<vmem>>, vector<2x256xf32>
      %299 = vector.broadcast %296 : f32 to vector<2x256xf32>
      %300 = arith.mulf %299, %298 : vector<2x256xf32>
      %c0_134 = arith.constant 0 : index
      %c67_135 = arith.constant 67 : index
      %301 = vector.load %arg9[%c0_134, %c67_135] : memref<2x358xf32, #tpu.memory_space<vmem>>, vector<2x256xf32>
      %302 = vector.broadcast %297 : f32 to vector<2x256xf32>
      %303 = arith.mulf %302, %301 : vector<2x256xf32>
      %304 = arith.addf %300, %303 : vector<2x256xf32>
      %305 = arith.addf %295, %304 : vector<2x256xf32>
      %c38 = arith.constant 38 : index
      %306 = memref.load %arg2[%c38] : memref<98xf32, #tpu.memory_space<smem>>
      %c87 = arith.constant 87 : index
      %307 = memref.load %arg2[%c87] : memref<98xf32, #tpu.memory_space<smem>>
      %c0_136 = arith.constant 0 : index
      %c83 = arith.constant 83 : index
      %308 = vector.load %arg8[%c0_136, %c83] : memref<2x358xf32, #tpu.memory_space<vmem>>, vector<2x256xf32>
      %309 = vector.broadcast %306 : f32 to vector<2x256xf32>
      %310 = arith.mulf %309, %308 : vector<2x256xf32>
      %c0_137 = arith.constant 0 : index
      %c83_138 = arith.constant 83 : index
      %311 = vector.load %arg9[%c0_137, %c83_138] : memref<2x358xf32, #tpu.memory_space<vmem>>, vector<2x256xf32>
      %312 = vector.broadcast %307 : f32 to vector<2x256xf32>
      %313 = arith.mulf %312, %311 : vector<2x256xf32>
      %314 = arith.addf %310, %313 : vector<2x256xf32>
      %315 = arith.addf %305, %314 : vector<2x256xf32>
      %c45 = arith.constant 45 : index
      %316 = memref.load %arg2[%c45] : memref<98xf32, #tpu.memory_space<smem>>
      %c94 = arith.constant 94 : index
      %317 = memref.load %arg2[%c94] : memref<98xf32, #tpu.memory_space<smem>>
      %c0_139 = arith.constant 0 : index
      %c99 = arith.constant 99 : index
      %318 = vector.load %arg8[%c0_139, %c99] : memref<2x358xf32, #tpu.memory_space<vmem>>, vector<2x256xf32>
      %319 = vector.broadcast %316 : f32 to vector<2x256xf32>
      %320 = arith.mulf %319, %318 : vector<2x256xf32>
      %c0_140 = arith.constant 0 : index
      %c99_141 = arith.constant 99 : index
      %321 = vector.load %arg9[%c0_140, %c99_141] : memref<2x358xf32, #tpu.memory_space<vmem>>, vector<2x256xf32>
      %322 = vector.broadcast %317 : f32 to vector<2x256xf32>
      %323 = arith.mulf %322, %321 : vector<2x256xf32>
      %324 = arith.addf %320, %323 : vector<2x256xf32>
      %325 = arith.addf %315, %324 : vector<2x256xf32>
      %326 = arith.addf %256, %325 : vector<2x256xf32>
      %c4 = arith.constant 4 : index
      %327 = memref.load %arg2[%c4] : memref<98xf32, #tpu.memory_space<smem>>
      %c53 = arith.constant 53 : index
      %328 = memref.load %arg2[%c53] : memref<98xf32, #tpu.memory_space<smem>>
      %c0_142 = arith.constant 0 : index
      %c4_143 = arith.constant 4 : index
      %329 = vector.load %arg8[%c0_142, %c4_143] : memref<2x358xf32, #tpu.memory_space<vmem>>, vector<2x256xf32>
      %330 = vector.broadcast %327 : f32 to vector<2x256xf32>
      %331 = arith.mulf %330, %329 : vector<2x256xf32>
      %c0_144 = arith.constant 0 : index
      %c4_145 = arith.constant 4 : index
      %332 = vector.load %arg9[%c0_144, %c4_145] : memref<2x358xf32, #tpu.memory_space<vmem>>, vector<2x256xf32>
      %333 = vector.broadcast %328 : f32 to vector<2x256xf32>
      %334 = arith.mulf %333, %332 : vector<2x256xf32>
      %335 = arith.addf %331, %334 : vector<2x256xf32>
      %c11 = arith.constant 11 : index
      %336 = memref.load %arg2[%c11] : memref<98xf32, #tpu.memory_space<smem>>
      %c60 = arith.constant 60 : index
      %337 = memref.load %arg2[%c60] : memref<98xf32, #tpu.memory_space<smem>>
      %c0_146 = arith.constant 0 : index
      %c20 = arith.constant 20 : index
      %338 = vector.load %arg8[%c0_146, %c20] : memref<2x358xf32, #tpu.memory_space<vmem>>, vector<2x256xf32>
      %339 = vector.broadcast %336 : f32 to vector<2x256xf32>
      %340 = arith.mulf %339, %338 : vector<2x256xf32>
      %c0_147 = arith.constant 0 : index
      %c20_148 = arith.constant 20 : index
      %341 = vector.load %arg9[%c0_147, %c20_148] : memref<2x358xf32, #tpu.memory_space<vmem>>, vector<2x256xf32>
      %342 = vector.broadcast %337 : f32 to vector<2x256xf32>
      %343 = arith.mulf %342, %341 : vector<2x256xf32>
      %344 = arith.addf %340, %343 : vector<2x256xf32>
      %345 = arith.addf %335, %344 : vector<2x256xf32>
      %c18_149 = arith.constant 18 : index
      %346 = memref.load %arg2[%c18_149] : memref<98xf32, #tpu.memory_space<smem>>
      %c67_150 = arith.constant 67 : index
      %347 = memref.load %arg2[%c67_150] : memref<98xf32, #tpu.memory_space<smem>>
      %c0_151 = arith.constant 0 : index
      %c36_152 = arith.constant 36 : index
      %348 = vector.load %arg8[%c0_151, %c36_152] : memref<2x358xf32, #tpu.memory_space<vmem>>, vector<2x256xf32>
      %349 = vector.broadcast %346 : f32 to vector<2x256xf32>
      %350 = arith.mulf %349, %348 : vector<2x256xf32>
      %c0_153 = arith.constant 0 : index
      %c36_154 = arith.constant 36 : index
      %351 = vector.load %arg9[%c0_153, %c36_154] : memref<2x358xf32, #tpu.memory_space<vmem>>, vector<2x256xf32>
      %352 = vector.broadcast %347 : f32 to vector<2x256xf32>
      %353 = arith.mulf %352, %351 : vector<2x256xf32>
      %354 = arith.addf %350, %353 : vector<2x256xf32>
      %355 = arith.addf %345, %354 : vector<2x256xf32>
      %c25 = arith.constant 25 : index
      %356 = memref.load %arg2[%c25] : memref<98xf32, #tpu.memory_space<smem>>
      %c74 = arith.constant 74 : index
      %357 = memref.load %arg2[%c74] : memref<98xf32, #tpu.memory_space<smem>>
      %c0_155 = arith.constant 0 : index
      %c52_156 = arith.constant 52 : index
      %358 = vector.load %arg8[%c0_155, %c52_156] : memref<2x358xf32, #tpu.memory_space<vmem>>, vector<2x256xf32>
      %359 = vector.broadcast %356 : f32 to vector<2x256xf32>
      %360 = arith.mulf %359, %358 : vector<2x256xf32>
      %c0_157 = arith.constant 0 : index
      %c52_158 = arith.constant 52 : index
      %361 = vector.load %arg9[%c0_157, %c52_158] : memref<2x358xf32, #tpu.memory_space<vmem>>, vector<2x256xf32>
      %362 = vector.broadcast %357 : f32 to vector<2x256xf32>
      %363 = arith.mulf %362, %361 : vector<2x256xf32>
      %364 = arith.addf %360, %363 : vector<2x256xf32>
      %365 = arith.addf %355, %364 : vector<2x256xf32>
      %c32_159 = arith.constant 32 : index
      %366 = memref.load %arg2[%c32_159] : memref<98xf32, #tpu.memory_space<smem>>
      %c81_160 = arith.constant 81 : index
      %367 = memref.load %arg2[%c81_160] : memref<98xf32, #tpu.memory_space<smem>>
      %c0_161 = arith.constant 0 : index
      %c68 = arith.constant 68 : index
      %368 = vector.load %arg8[%c0_161, %c68] : memref<2x358xf32, #tpu.memory_space<vmem>>, vector<2x256xf32>
      %369 = vector.broadcast %366 : f32 to vector<2x256xf32>
      %370 = arith.mulf %369, %368 : vector<2x256xf32>
      %c0_162 = arith.constant 0 : index
      %c68_163 = arith.constant 68 : index
      %371 = vector.load %arg9[%c0_162, %c68_163] : memref<2x358xf32, #tpu.memory_space<vmem>>, vector<2x256xf32>
      %372 = vector.broadcast %367 : f32 to vector<2x256xf32>
      %373 = arith.mulf %372, %371 : vector<2x256xf32>
      %374 = arith.addf %370, %373 : vector<2x256xf32>
      %375 = arith.addf %365, %374 : vector<2x256xf32>
      %c39 = arith.constant 39 : index
      %376 = memref.load %arg2[%c39] : memref<98xf32, #tpu.memory_space<smem>>
      %c88 = arith.constant 88 : index
      %377 = memref.load %arg2[%c88] : memref<98xf32, #tpu.memory_space<smem>>
      %c0_164 = arith.constant 0 : index
      %c84_165 = arith.constant 84 : index
      %378 = vector.load %arg8[%c0_164, %c84_165] : memref<2x358xf32, #tpu.memory_space<vmem>>, vector<2x256xf32>
      %379 = vector.broadcast %376 : f32 to vector<2x256xf32>
      %380 = arith.mulf %379, %378 : vector<2x256xf32>
      %c0_166 = arith.constant 0 : index
      %c84_167 = arith.constant 84 : index
      %381 = vector.load %arg9[%c0_166, %c84_167] : memref<2x358xf32, #tpu.memory_space<vmem>>, vector<2x256xf32>
      %382 = vector.broadcast %377 : f32 to vector<2x256xf32>
      %383 = arith.mulf %382, %381 : vector<2x256xf32>
      %384 = arith.addf %380, %383 : vector<2x256xf32>
      %385 = arith.addf %375, %384 : vector<2x256xf32>
      %c46 = arith.constant 46 : index
      %386 = memref.load %arg2[%c46] : memref<98xf32, #tpu.memory_space<smem>>
      %c95 = arith.constant 95 : index
      %387 = memref.load %arg2[%c95] : memref<98xf32, #tpu.memory_space<smem>>
      %c0_168 = arith.constant 0 : index
      %c100 = arith.constant 100 : index
      %388 = vector.load %arg8[%c0_168, %c100] : memref<2x358xf32, #tpu.memory_space<vmem>>, vector<2x256xf32>
      %389 = vector.broadcast %386 : f32 to vector<2x256xf32>
      %390 = arith.mulf %389, %388 : vector<2x256xf32>
      %c0_169 = arith.constant 0 : index
      %c100_170 = arith.constant 100 : index
      %391 = vector.load %arg9[%c0_169, %c100_170] : memref<2x358xf32, #tpu.memory_space<vmem>>, vector<2x256xf32>
      %392 = vector.broadcast %387 : f32 to vector<2x256xf32>
      %393 = arith.mulf %392, %391 : vector<2x256xf32>
      %394 = arith.addf %390, %393 : vector<2x256xf32>
      %395 = arith.addf %385, %394 : vector<2x256xf32>
      %396 = vector.extract_strided_slice %38 {offsets = [4, 0], sizes = [1, 256], strides = [1, 1]} : vector<7x256xf32> to vector<1x256xf32>
      %397 = vector.broadcast %396 : vector<1x256xf32> to vector<2x256xf32>
      %398 = arith.mulf %395, %397 : vector<2x256xf32>
      %399 = arith.addf %326, %398 : vector<2x256xf32>
      %c5 = arith.constant 5 : index
      %400 = memref.load %arg2[%c5] : memref<98xf32, #tpu.memory_space<smem>>
      %c54 = arith.constant 54 : index
      %401 = memref.load %arg2[%c54] : memref<98xf32, #tpu.memory_space<smem>>
      %c0_171 = arith.constant 0 : index
      %c5_172 = arith.constant 5 : index
      %402 = vector.load %arg8[%c0_171, %c5_172] : memref<2x358xf32, #tpu.memory_space<vmem>>, vector<2x256xf32>
      %403 = vector.broadcast %400 : f32 to vector<2x256xf32>
      %404 = arith.mulf %403, %402 : vector<2x256xf32>
      %c0_173 = arith.constant 0 : index
      %c5_174 = arith.constant 5 : index
      %405 = vector.load %arg9[%c0_173, %c5_174] : memref<2x358xf32, #tpu.memory_space<vmem>>, vector<2x256xf32>
      %406 = vector.broadcast %401 : f32 to vector<2x256xf32>
      %407 = arith.mulf %406, %405 : vector<2x256xf32>
      %408 = arith.addf %404, %407 : vector<2x256xf32>
      %c12 = arith.constant 12 : index
      %409 = memref.load %arg2[%c12] : memref<98xf32, #tpu.memory_space<smem>>
      %c61 = arith.constant 61 : index
      %410 = memref.load %arg2[%c61] : memref<98xf32, #tpu.memory_space<smem>>
      %c0_175 = arith.constant 0 : index
      %c21_176 = arith.constant 21 : index
      %411 = vector.load %arg8[%c0_175, %c21_176] : memref<2x358xf32, #tpu.memory_space<vmem>>, vector<2x256xf32>
      %412 = vector.broadcast %409 : f32 to vector<2x256xf32>
      %413 = arith.mulf %412, %411 : vector<2x256xf32>
      %c0_177 = arith.constant 0 : index
      %c21_178 = arith.constant 21 : index
      %414 = vector.load %arg9[%c0_177, %c21_178] : memref<2x358xf32, #tpu.memory_space<vmem>>, vector<2x256xf32>
      %415 = vector.broadcast %410 : f32 to vector<2x256xf32>
      %416 = arith.mulf %415, %414 : vector<2x256xf32>
      %417 = arith.addf %413, %416 : vector<2x256xf32>
      %418 = arith.addf %408, %417 : vector<2x256xf32>
      %c19_179 = arith.constant 19 : index
      %419 = memref.load %arg2[%c19_179] : memref<98xf32, #tpu.memory_space<smem>>
      %c68_180 = arith.constant 68 : index
      %420 = memref.load %arg2[%c68_180] : memref<98xf32, #tpu.memory_space<smem>>
      %c0_181 = arith.constant 0 : index
      %c37_182 = arith.constant 37 : index
      %421 = vector.load %arg8[%c0_181, %c37_182] : memref<2x358xf32, #tpu.memory_space<vmem>>, vector<2x256xf32>
      %422 = vector.broadcast %419 : f32 to vector<2x256xf32>
      %423 = arith.mulf %422, %421 : vector<2x256xf32>
      %c0_183 = arith.constant 0 : index
      %c37_184 = arith.constant 37 : index
      %424 = vector.load %arg9[%c0_183, %c37_184] : memref<2x358xf32, #tpu.memory_space<vmem>>, vector<2x256xf32>
      %425 = vector.broadcast %420 : f32 to vector<2x256xf32>
      %426 = arith.mulf %425, %424 : vector<2x256xf32>
      %427 = arith.addf %423, %426 : vector<2x256xf32>
      %428 = arith.addf %418, %427 : vector<2x256xf32>
      %c26 = arith.constant 26 : index
      %429 = memref.load %arg2[%c26] : memref<98xf32, #tpu.memory_space<smem>>
      %c75 = arith.constant 75 : index
      %430 = memref.load %arg2[%c75] : memref<98xf32, #tpu.memory_space<smem>>
      %c0_185 = arith.constant 0 : index
      %c53_186 = arith.constant 53 : index
      %431 = vector.load %arg8[%c0_185, %c53_186] : memref<2x358xf32, #tpu.memory_space<vmem>>, vector<2x256xf32>
      %432 = vector.broadcast %429 : f32 to vector<2x256xf32>
      %433 = arith.mulf %432, %431 : vector<2x256xf32>
      %c0_187 = arith.constant 0 : index
      %c53_188 = arith.constant 53 : index
      %434 = vector.load %arg9[%c0_187, %c53_188] : memref<2x358xf32, #tpu.memory_space<vmem>>, vector<2x256xf32>
      %435 = vector.broadcast %430 : f32 to vector<2x256xf32>
      %436 = arith.mulf %435, %434 : vector<2x256xf32>
      %437 = arith.addf %433, %436 : vector<2x256xf32>
      %438 = arith.addf %428, %437 : vector<2x256xf32>
      %c33_189 = arith.constant 33 : index
      %439 = memref.load %arg2[%c33_189] : memref<98xf32, #tpu.memory_space<smem>>
      %c82_190 = arith.constant 82 : index
      %440 = memref.load %arg2[%c82_190] : memref<98xf32, #tpu.memory_space<smem>>
      %c0_191 = arith.constant 0 : index
      %c69 = arith.constant 69 : index
      %441 = vector.load %arg8[%c0_191, %c69] : memref<2x358xf32, #tpu.memory_space<vmem>>, vector<2x256xf32>
      %442 = vector.broadcast %439 : f32 to vector<2x256xf32>
      %443 = arith.mulf %442, %441 : vector<2x256xf32>
      %c0_192 = arith.constant 0 : index
      %c69_193 = arith.constant 69 : index
      %444 = vector.load %arg9[%c0_192, %c69_193] : memref<2x358xf32, #tpu.memory_space<vmem>>, vector<2x256xf32>
      %445 = vector.broadcast %440 : f32 to vector<2x256xf32>
      %446 = arith.mulf %445, %444 : vector<2x256xf32>
      %447 = arith.addf %443, %446 : vector<2x256xf32>
      %448 = arith.addf %438, %447 : vector<2x256xf32>
      %c40 = arith.constant 40 : index
      %449 = memref.load %arg2[%c40] : memref<98xf32, #tpu.memory_space<smem>>
      %c89 = arith.constant 89 : index
      %450 = memref.load %arg2[%c89] : memref<98xf32, #tpu.memory_space<smem>>
      %c0_194 = arith.constant 0 : index
      %c85_195 = arith.constant 85 : index
      %451 = vector.load %arg8[%c0_194, %c85_195] : memref<2x358xf32, #tpu.memory_space<vmem>>, vector<2x256xf32>
      %452 = vector.broadcast %449 : f32 to vector<2x256xf32>
      %453 = arith.mulf %452, %451 : vector<2x256xf32>
      %c0_196 = arith.constant 0 : index
      %c85_197 = arith.constant 85 : index
      %454 = vector.load %arg9[%c0_196, %c85_197] : memref<2x358xf32, #tpu.memory_space<vmem>>, vector<2x256xf32>
      %455 = vector.broadcast %450 : f32 to vector<2x256xf32>
      %456 = arith.mulf %455, %454 : vector<2x256xf32>
      %457 = arith.addf %453, %456 : vector<2x256xf32>
      %458 = arith.addf %448, %457 : vector<2x256xf32>
      %c47 = arith.constant 47 : index
      %459 = memref.load %arg2[%c47] : memref<98xf32, #tpu.memory_space<smem>>
      %c96_198 = arith.constant 96 : index
      %460 = memref.load %arg2[%c96_198] : memref<98xf32, #tpu.memory_space<smem>>
      %c0_199 = arith.constant 0 : index
      %c101 = arith.constant 101 : index
      %461 = vector.load %arg8[%c0_199, %c101] : memref<2x358xf32, #tpu.memory_space<vmem>>, vector<2x256xf32>
      %462 = vector.broadcast %459 : f32 to vector<2x256xf32>
      %463 = arith.mulf %462, %461 : vector<2x256xf32>
      %c0_200 = arith.constant 0 : index
      %c101_201 = arith.constant 101 : index
      %464 = vector.load %arg9[%c0_200, %c101_201] : memref<2x358xf32, #tpu.memory_space<vmem>>, vector<2x256xf32>
      %465 = vector.broadcast %460 : f32 to vector<2x256xf32>
      %466 = arith.mulf %465, %464 : vector<2x256xf32>
      %467 = arith.addf %463, %466 : vector<2x256xf32>
      %468 = arith.addf %458, %467 : vector<2x256xf32>
      %469 = vector.extract_strided_slice %38 {offsets = [5, 0], sizes = [1, 256], strides = [1, 1]} : vector<7x256xf32> to vector<1x256xf32>
      %470 = vector.broadcast %469 : vector<1x256xf32> to vector<2x256xf32>
      %471 = arith.mulf %468, %470 : vector<2x256xf32>
      %472 = arith.addf %399, %471 : vector<2x256xf32>
      %c6 = arith.constant 6 : index
      %473 = memref.load %arg2[%c6] : memref<98xf32, #tpu.memory_space<smem>>
      %c55 = arith.constant 55 : index
      %474 = memref.load %arg2[%c55] : memref<98xf32, #tpu.memory_space<smem>>
      %c0_202 = arith.constant 0 : index
      %c6_203 = arith.constant 6 : index
      %475 = vector.load %arg8[%c0_202, %c6_203] : memref<2x358xf32, #tpu.memory_space<vmem>>, vector<2x256xf32>
      %476 = vector.broadcast %473 : f32 to vector<2x256xf32>
      %477 = arith.mulf %476, %475 : vector<2x256xf32>
      %c0_204 = arith.constant 0 : index
      %c6_205 = arith.constant 6 : index
      %478 = vector.load %arg9[%c0_204, %c6_205] : memref<2x358xf32, #tpu.memory_space<vmem>>, vector<2x256xf32>
      %479 = vector.broadcast %474 : f32 to vector<2x256xf32>
      %480 = arith.mulf %479, %478 : vector<2x256xf32>
      %481 = arith.addf %477, %480 : vector<2x256xf32>
      %c13 = arith.constant 13 : index
      %482 = memref.load %arg2[%c13] : memref<98xf32, #tpu.memory_space<smem>>
      %c62 = arith.constant 62 : index
      %483 = memref.load %arg2[%c62] : memref<98xf32, #tpu.memory_space<smem>>
      %c0_206 = arith.constant 0 : index
      %c22_207 = arith.constant 22 : index
      %484 = vector.load %arg8[%c0_206, %c22_207] : memref<2x358xf32, #tpu.memory_space<vmem>>, vector<2x256xf32>
      %485 = vector.broadcast %482 : f32 to vector<2x256xf32>
      %486 = arith.mulf %485, %484 : vector<2x256xf32>
      %c0_208 = arith.constant 0 : index
      %c22_209 = arith.constant 22 : index
      %487 = vector.load %arg9[%c0_208, %c22_209] : memref<2x358xf32, #tpu.memory_space<vmem>>, vector<2x256xf32>
      %488 = vector.broadcast %483 : f32 to vector<2x256xf32>
      %489 = arith.mulf %488, %487 : vector<2x256xf32>
      %490 = arith.addf %486, %489 : vector<2x256xf32>
      %491 = arith.addf %481, %490 : vector<2x256xf32>
      %c20_210 = arith.constant 20 : index
      %492 = memref.load %arg2[%c20_210] : memref<98xf32, #tpu.memory_space<smem>>
      %c69_211 = arith.constant 69 : index
      %493 = memref.load %arg2[%c69_211] : memref<98xf32, #tpu.memory_space<smem>>
      %c0_212 = arith.constant 0 : index
      %c38_213 = arith.constant 38 : index
      %494 = vector.load %arg8[%c0_212, %c38_213] : memref<2x358xf32, #tpu.memory_space<vmem>>, vector<2x256xf32>
      %495 = vector.broadcast %492 : f32 to vector<2x256xf32>
      %496 = arith.mulf %495, %494 : vector<2x256xf32>
      %c0_214 = arith.constant 0 : index
      %c38_215 = arith.constant 38 : index
      %497 = vector.load %arg9[%c0_214, %c38_215] : memref<2x358xf32, #tpu.memory_space<vmem>>, vector<2x256xf32>
      %498 = vector.broadcast %493 : f32 to vector<2x256xf32>
      %499 = arith.mulf %498, %497 : vector<2x256xf32>
      %500 = arith.addf %496, %499 : vector<2x256xf32>
      %501 = arith.addf %491, %500 : vector<2x256xf32>
      %c27 = arith.constant 27 : index
      %502 = memref.load %arg2[%c27] : memref<98xf32, #tpu.memory_space<smem>>
      %c76 = arith.constant 76 : index
      %503 = memref.load %arg2[%c76] : memref<98xf32, #tpu.memory_space<smem>>
      %c0_216 = arith.constant 0 : index
      %c54_217 = arith.constant 54 : index
      %504 = vector.load %arg8[%c0_216, %c54_217] : memref<2x358xf32, #tpu.memory_space<vmem>>, vector<2x256xf32>
      %505 = vector.broadcast %502 : f32 to vector<2x256xf32>
      %506 = arith.mulf %505, %504 : vector<2x256xf32>
      %c0_218 = arith.constant 0 : index
      %c54_219 = arith.constant 54 : index
      %507 = vector.load %arg9[%c0_218, %c54_219] : memref<2x358xf32, #tpu.memory_space<vmem>>, vector<2x256xf32>
      %508 = vector.broadcast %503 : f32 to vector<2x256xf32>
      %509 = arith.mulf %508, %507 : vector<2x256xf32>
      %510 = arith.addf %506, %509 : vector<2x256xf32>
      %511 = arith.addf %501, %510 : vector<2x256xf32>
      %c34_220 = arith.constant 34 : index
      %512 = memref.load %arg2[%c34_220] : memref<98xf32, #tpu.memory_space<smem>>
      %c83_221 = arith.constant 83 : index
      %513 = memref.load %arg2[%c83_221] : memref<98xf32, #tpu.memory_space<smem>>
      %c0_222 = arith.constant 0 : index
      %c70_223 = arith.constant 70 : index
      %514 = vector.load %arg8[%c0_222, %c70_223] : memref<2x358xf32, #tpu.memory_space<vmem>>, vector<2x256xf32>
      %515 = vector.broadcast %512 : f32 to vector<2x256xf32>
      %516 = arith.mulf %515, %514 : vector<2x256xf32>
      %c0_224 = arith.constant 0 : index
      %c70_225 = arith.constant 70 : index
      %517 = vector.load %arg9[%c0_224, %c70_225] : memref<2x358xf32, #tpu.memory_space<vmem>>, vector<2x256xf32>
      %518 = vector.broadcast %513 : f32 to vector<2x256xf32>
      %519 = arith.mulf %518, %517 : vector<2x256xf32>
      %520 = arith.addf %516, %519 : vector<2x256xf32>
      %521 = arith.addf %511, %520 : vector<2x256xf32>
      %c41 = arith.constant 41 : index
      %522 = memref.load %arg2[%c41] : memref<98xf32, #tpu.memory_space<smem>>
      %c90 = arith.constant 90 : index
      %523 = memref.load %arg2[%c90] : memref<98xf32, #tpu.memory_space<smem>>
      %c0_226 = arith.constant 0 : index
      %c86_227 = arith.constant 86 : index
      %524 = vector.load %arg8[%c0_226, %c86_227] : memref<2x358xf32, #tpu.memory_space<vmem>>, vector<2x256xf32>
      %525 = vector.broadcast %522 : f32 to vector<2x256xf32>
      %526 = arith.mulf %525, %524 : vector<2x256xf32>
      %c0_228 = arith.constant 0 : index
      %c86_229 = arith.constant 86 : index
      %527 = vector.load %arg9[%c0_228, %c86_229] : memref<2x358xf32, #tpu.memory_space<vmem>>, vector<2x256xf32>
      %528 = vector.broadcast %523 : f32 to vector<2x256xf32>
      %529 = arith.mulf %528, %527 : vector<2x256xf32>
      %530 = arith.addf %526, %529 : vector<2x256xf32>
      %531 = arith.addf %521, %530 : vector<2x256xf32>
      %c48_230 = arith.constant 48 : index
      %532 = memref.load %arg2[%c48_230] : memref<98xf32, #tpu.memory_space<smem>>
      %c97_231 = arith.constant 97 : index
      %533 = memref.load %arg2[%c97_231] : memref<98xf32, #tpu.memory_space<smem>>
      %c0_232 = arith.constant 0 : index
      %c102 = arith.constant 102 : index
      %534 = vector.load %arg8[%c0_232, %c102] : memref<2x358xf32, #tpu.memory_space<vmem>>, vector<2x256xf32>
      %535 = vector.broadcast %532 : f32 to vector<2x256xf32>
      %536 = arith.mulf %535, %534 : vector<2x256xf32>
      %c0_233 = arith.constant 0 : index
      %c102_234 = arith.constant 102 : index
      %537 = vector.load %arg9[%c0_233, %c102_234] : memref<2x358xf32, #tpu.memory_space<vmem>>, vector<2x256xf32>
      %538 = vector.broadcast %533 : f32 to vector<2x256xf32>
      %539 = arith.mulf %538, %537 : vector<2x256xf32>
      %540 = arith.addf %536, %539 : vector<2x256xf32>
      %541 = arith.addf %531, %540 : vector<2x256xf32>
      %542 = vector.extract_strided_slice %38 {offsets = [6, 0], sizes = [1, 256], strides = [1, 1]} : vector<7x256xf32> to vector<1x256xf32>
      %543 = vector.broadcast %542 : vector<1x256xf32> to vector<2x256xf32>
      %544 = arith.mulf %541, %543 : vector<2x256xf32>
      %545 = arith.addf %472, %544 : vector<2x256xf32>
      %546 = arith.negf %545 : vector<2x256xf32>
      %547 = math.exp %546 : vector<2x256xf32>
      %cst_235 = arith.constant 1.000000e+00 : f32
      %548 = vector.broadcast %cst_235 : f32 to vector<2x256xf32>
      %549 = arith.addf %548, %547 : vector<2x256xf32>
      %550 = arith.divf %548, %549 : vector<2x256xf32>
      %c0_236 = arith.constant 0 : index
      %c0_237 = arith.constant 0 : index
      %c0_238 = arith.constant 0 : index
      %551 = vector.load %arg5[%c0_236, %c0_237, %c0_238] : memref<2x1x256xf32, #tpu.memory_space<vmem>>, vector<2x1x256xf32>
      %552 = vector.shape_cast %551 : vector<2x1x256xf32> to vector<2x256xf32>
      %553 = vector.shape_cast %550 : vector<2x256xf32> to vector<2x1x256xf32>
      tpu.vector_store %arg5[%c0_236, %c0_237, %c0_238], %553 {strides = array<i32>} : memref<2x1x256xf32, #tpu.memory_space<vmem>>, vector<2x1x256xf32>,
    } else {
    }
    return
  }
  func.func @transform_0(%arg0: i32, %arg1: i32) -> i32 {
    %c0_i32 = arith.constant 0 : i32
    %c0_i32_0 = arith.constant 0 : i32
    return %c0_i32 : i32
  }
  func.func @transform_1(%arg0: i32, %arg1: i32) -> (i32, i32) {
    %c0_i32 = arith.constant 0 : i32
    %c0_i32_0 = arith.constant 0 : i32
    %c0_i32_1 = arith.constant 0 : i32
    return %c0_i32, %c0_i32_0 : i32, i32
  }
  func.func @transform_2(%arg0: i32, %arg1: i32) -> (i32, i32, i32) {
    %c0_i32 = arith.constant 0 : i32
    %c0_i32_0 = arith.constant 0 : i32
    return %arg0, %arg1, %c0_i32 : i32, i32, i32
  }
  func.func @transform_3(%arg0: i32, %arg1: i32) -> (i32, i32, i32) {
    %c0_i32 = arith.constant 0 : i32
    %c0_i32_0 = arith.constant 0 : i32
    %c0_i32_1 = arith.constant 0 : i32
    return %arg0, %c0_i32, %c0_i32_0 : i32, i32, i32
  }
}

</mosaic_0001>

<llo_original>
// kernel: tpu_custom_call.1
$region0: #{tpu_custom_call.1}
  #allocation0 [shape = 'u32[]', space=smem, size = 0x4, offset = 0x4, fixed_abs, tag = 'smem constant byte address 0x4 - core index']
  #allocation1 [shape = 'u32[72,128]{1,0:T(1,128)}', space=vmem, size = 0x9000, scoped, tag = 'internal scratch']
  #allocation2 [shape = 'f32[2,256]{1,0:T(2,128)}', space=vmem, size = 0x800, scoped, tag = 'scratch operand']
  #allocation3 [shape = 'f32[2,256]{1,0:T(2,128)}', space=vmem, size = 0x800, scoped, tag = 'scratch operand']
  #allocation4 [shape = 'f32[2,358]{1,0:T(2,128)}', space=vmem, size = 0xc00, scoped, tag = 'scratch operand']
  #allocation5 [shape = 'f32[2,358]{1,0:T(2,128)}', space=vmem, size = 0xc00, scoped, tag = 'scratch operand']
  %s0 = inlined_call_operand.hbm [shape: f32[98], index: 0, kind: input, shape index: {}]
  %s1 = inlined_call_operand.hbm [shape: f32[7,256], index: 1, kind: input, shape index: {}]
  %s2 = inlined_call_operand.hbm [shape: f32[2,4,256], index: 2, kind: input, shape index: {}]
  %s3 = inlined_call_operand.hbm [shape: f32[2,1,256], index: 3, kind: output, shape index: {}]
  %s4 = sld [smem:[#allocation0]]
  $region42: #{tpu_custom_call.1} parent=0
    _
  %s6 = ssub.s32 1, %s4
  %s7 = scalar_select 0, %s6, %s4
  $region1: #{tpu_custom_call.1} parent=0
    #allocation6 [shape = 'u8[512]{0}', space=smem, size = 0x200, scoped, tag = 'input window, operand 0, single buffered']
    #allocation7 [shape = 's32[1]{0}', space=sflag, size = 0x4, scoped, tag = 'scoped memory for tpu_custom_call.1']
    #allocation8 [shape = 's32[1]{0}', space=sflag, size = 0x4, scoped, tag = 'scoped memory for tpu_custom_call.1']
    #allocation9 [shape = 's32[1]{0}', space=sflag, size = 0x4, scoped, tag = 'scoped memory for tpu_custom_call.1']
    #allocation10 [shape = 'u8[8192]{0}', space=vmem, size = 0x2000, scoped, tag = 'input window, operand 1, single buffered']
    #allocation11 [shape = 'u8[8192]{0}', space=vmem, size = 0x2000, scoped, tag = 'input window, operand 2, single buffered']
    #allocation12 [shape = 's32[1]{0}', space=sflag, size = 0x4, scoped, tag = 'scoped memory for tpu_custom_call.1']
    #allocation13 [shape = 'u8[2048]{0}', space=vmem, size = 0x800, scoped, tag = 'output window, operand 0, single buffered']
    %8 = vsyncpa [#allocation9], 0
    %9 = vsyncpa [#allocation7], 0
    %10 = vsyncpa [#allocation12], 0
    %11 = vsyncpa [#allocation8], 0
    // Predicated region
    $region2: #{tpu_custom_call.1} parent=1 // pred_check
      _
    $region3: #{tpu_custom_call.1} parent=1 // pred_check_branch
      %13 = sbr.rel (0) target = $region5
    $region4: #{tpu_custom_call.1} parent=1 // pred_region
      %15 = vsyncadd [#allocation9], 0
      %s17 = sshll.u32 %s0, 4
      %s18 = int_to_ptr.hbm [resolvable:$true] %s17
      %20 = dma.hbm_to_smem %s18, 16, [#allocation6], [#allocation9]
    $region5: #{tpu_custom_call.1} parent=1 // pred_fallthru
      _
    // Predicated region
    $region6: #{tpu_custom_call.1} parent=1 // pred_check
      _
    $region7: #{tpu_custom_call.1} parent=1 // pred_check_branch
      %22 = sbr.rel (0) target = $region9
    $region8: #{tpu_custom_call.1} parent=1 // pred_region
      %24 = vsyncadd [#allocation7], 0
      %s26 = sshll.u32 %s1, 4
      %s27 = int_to_ptr.hbm [resolvable:$true] %s26
      %s28 = sshll.u32 [#allocation10], 4
      %s29 = int_to_ptr.vmem [resolvable:$true] %s28
      %31 = dma.hbm_to_vmem [thread:$0]  %s27, 256, %s29, [#allocation7]
    $region9: #{tpu_custom_call.1} parent=1 // pred_fallthru
      _
    // Predicated region
    $region10: #{tpu_custom_call.1} parent=1 // pred_check
      _
    $region11: #{tpu_custom_call.1} parent=1 // pred_check_branch
      %33 = sbr.rel (0) target = $region13
    $region12: #{tpu_custom_call.1} parent=1 // pred_region
      %35 = vsyncadd [#allocation12], 0
      %s36 = sshll.u32 %s2, 4
      %s37 = int_to_ptr.hbm [resolvable:$true] %s36
      %s38 = sshll.u32 [#allocation11], 4
      %s39 = int_to_ptr.vmem [resolvable:$true] %s38
      %44 = dma.hbm_to_vmem [thread:$0]  %s37, 256, %s39, [#allocation12], 128, 128, 8
    $region13: #{tpu_custom_call.1} parent=1 // pred_fallthru
      _
    // Predicated region
    $region14: #{tpu_custom_call.1} parent=1 // pred_check
      _
    $region15: #{tpu_custom_call.1} parent=1 // pred_check_branch
      %46 = sbr.rel (0) target = $region17
    $region16: #{tpu_custom_call.1} parent=1 // pred_region
      %48 = dma.done [#allocation9], 16
    $region17: #{tpu_custom_call.1} parent=1 // pred_fallthru
      _
    // Predicated region
    $region18: #{tpu_custom_call.1} parent=1 // pred_check
      _
    $region19: #{tpu_custom_call.1} parent=1 // pred_check_branch
      %50 = sbr.rel (0) target = $region21
    $region20: #{tpu_custom_call.1} parent=1 // pred_region
      %52 = dma.done [#allocation7], 256
    $region21: #{tpu_custom_call.1} parent=1 // pred_fallthru
      _
    // Predicated region
    $region22: #{tpu_custom_call.1} parent=1 // pred_check
      _
    $region23: #{tpu_custom_call.1} parent=1 // pred_check_branch
      %54 = sbr.rel (0) target = $region25
    $region24: #{tpu_custom_call.1} parent=1 // pred_region
      %56 = dma.done [#allocation12], 256
    $region25: #{tpu_custom_call.1} parent=1 // pred_fallthru
      _
    %57 = sfence
    %p58 = scmp.eq.s32.totalorder 0, 0
    // Predicated region
    $region26: #{tpu_custom_call.1} parent=1 // pred_check
      %p59 = pneg %p58
    $region27: #{tpu_custom_call.1} parent=1 // pred_check_branch
      %61 = sbr.rel (%p59) target = $region29
    $region28: #{tpu_custom_call.1} parent=1 // pred_region
      %62 = vst [vmem:[#allocation2] sm:$0xf] 0.0
      %63 = vst [vmem:[#allocation3] sm:$0xf] -inf
    $region29: #{tpu_custom_call.1} parent=1 // pred_fallthru
      _
    %v64 = vld [vmem:[#allocation11] sm:$0xff]
    %66 = vst [vmem:[#allocation1] ss:$2 sm:$0xff] %v64
    %v67 = vld.sshfl [vmem:[#allocation1] sm:$0xff pattern:$0x75316420]
    %v68 = vld.sshfl [vmem:[#allocation1 + $0x8] sm:$0xff pattern:$0x75316420]
    %vm71 = vcmask 1043456
    %v72 = vsel %vm71, %v67, 0.0
    %v73 = vrot.slane %v72, 4
    %v74 = vadd.f32 %v72, %v73
    %v75 = vrot.slane %v74, 2
    %v76 = vadd.f32 %v74, %v75
    %v77 = vrot.slane %v76, 1
    %v78 = vadd.f32 %v76, %v77
    %v79 = vsel %vm71, %v68, 0.0
    %v80 = vrot.slane %v79, 4
    %v81 = vadd.f32 %v79, %v80
    %v82 = vrot.slane %v81, 2
    %v83 = vadd.f32 %v81, %v82
    %v84 = vrot.slane %v83, 1
    %v85 = vadd.f32 %v83, %v84
    %86 = vst [vmem:[#allocation1] ss:$2 sm:$0xff] %v64
    %v87 = vld.sshfl [vmem:[#allocation1] sm:$0xff pattern:$0x75316420]
    %v88 = vld.sshfl [vmem:[#allocation1 + $0x8] sm:$0xff pattern:$0x75316420]
    %v91 = vsel %vm71, %v87, -inf
    %v92 = vrot.slane %v91, 4
    %v93 = vmax.f32 %v91, %v92
    %v94 = vrot.slane %v93, 2
    %v95 = vmax.f32 %v93, %v94
    %v96 = vrot.slane %v95, 1
    %v97 = vmax.f32 %v95, %v96
    %v98 = vsel %vm71, %v88, -inf
    %v99 = vrot.slane %v98, 4
    %v100 = vmax.f32 %v98, %v99
    %v101 = vrot.slane %v100, 2
    %v102 = vmax.f32 %v100, %v101
    %v103 = vrot.slane %v102, 1
    %v104 = vmax.f32 %v102, %v103
    %v105 = vld [vmem:[#allocation2] ss:$2 sm:$0x3]
    %v108 = vrot.slane %v85, 7
    %vm109 = vcmask 1040384
    %v110 = vsel %vm109, %v78, %v108
    %v112 = vadd.f32 %v105, %v110
    %v113 = vlaneseq
    %vm114 = vcmp.ge.s32.totalorder %v113, 0
    %vm115 = vcmp.lt.s32.totalorder %v113, 256
    %vm116 = vmand %vm114, %vm115
    %117 = vst.msk [vmem:[#allocation2] ss:$2 sm:$0x3] %vm116, %v112
    %v118 = vld [vmem:[#allocation3] ss:$2 sm:$0x3]
    %v121 = vrot.slane %v104, 7
    %v122 = vsel %vm109, %v97, %v121
    %v124 = vmax.f32 %v118, %v122
    %125 = vst.msk [vmem:[#allocation3] ss:$2 sm:$0x3] %vm116, %v124
    %s126 = scalar_lea.vmem [#allocation11], 8
    %v127 = vld [vmem:[%s126] sm:$0xff]
    %129 = vst [vmem:[#allocation1] ss:$2 sm:$0xff] %v127
    %v130 = vld.sshfl [vmem:[#allocation1] sm:$0xff pattern:$0x75316420]
    %v131 = vld.sshfl [vmem:[#allocation1 + $0x8] sm:$0xff pattern:$0x75316420]
    %v134 = vsel %vm71, %v130, 0.0
    %v135 = vrot.slane %v134, 4
    %v136 = vadd.f32 %v134, %v135
    %v137 = vrot.slane %v136, 2
    %v138 = vadd.f32 %v136, %v137
    %v139 = vrot.slane %v138, 1
    %v140 = vadd.f32 %v138, %v139
    %v141 = vsel %vm71, %v131, 0.0
    %v142 = vrot.slane %v141, 4
    %v143 = vadd.f32 %v141, %v142
    %v144 = vrot.slane %v143, 2
    %v145 = vadd.f32 %v143, %v144
    %v146 = vrot.slane %v145, 1
    %v147 = vadd.f32 %v145, %v146
    %148 = vst [vmem:[#allocation1] ss:$2 sm:$0xff] %v127
    %v149 = vld.sshfl [vmem:[#allocation1] sm:$0xff pattern:$0x75316420]
    %v150 = vld.sshfl [vmem:[#allocation1 + $0x8] sm:$0xff pattern:$0x75316420]
    %v153 = vsel %vm71, %v149, -inf
    %v154 = vrot.slane %v153, 4
    %v155 = vmax.f32 %v153, %v154
    %v156 = vrot.slane %v155, 2
    %v157 = vmax.f32 %v155, %v156
    %v158 = vrot.slane %v157, 1
    %v159 = vmax.f32 %v157, %v158
    %v160 = vsel %vm71, %v150, -inf
    %v161 = vrot.slane %v160, 4
    %v162 = vmax.f32 %v160, %v161
    %v163 = vrot.slane %v162, 2
    %v164 = vmax.f32 %v162, %v163
    %v165 = vrot.slane %v164, 1
    %v166 = vmax.f32 %v164, %v165
    %s167 = scalar_lea.vmem [#allocation2], 1
    %v168 = vld [vmem:[%s167] ss:$2 sm:$0x3]
    %v171 = vrot.slane %v147, 7
    %v172 = vsel %vm109, %v140, %v171
    %v174 = vadd.f32 %v168, %v172
    %175 = vst.msk [vmem:[%s167] ss:$2 sm:$0x3] %vm116, %v174
    %s176 = scalar_lea.vmem [#allocation3], 1
    %v177 = vld [vmem:[%s176] ss:$2 sm:$0x3]
    %v180 = vrot.slane %v166, 7
    %v181 = vsel %vm109, %v159, %v180
    %v183 = vmax.f32 %v177, %v181
    %184 = vst.msk [vmem:[%s176] ss:$2 sm:$0x3] %vm116, %v183
    // Predicated region
    $region30: #{tpu_custom_call.1} parent=1 // pred_check
      %p185 = pneg %p58
    $region31: #{tpu_custom_call.1} parent=1 // pred_check_branch
      %187 = sbr.rel (%p185) target = $region33
    $region32: #{tpu_custom_call.1} parent=1 // pred_region
      %vm188 = vcmask 1041408
      %vm189 = vcmask 1043458
      %vm190 = vmor %vm189, %vm188
      %vm191 = vcmask 832516
      %vm192 = vmor %vm191, %vm190
      %193 = vst.msk [vmem:[#allocation4] sm:$0x3f] %vm192, 0.0
      %194 = vst.msk [vmem:[#allocation5] sm:$0x3f] %vm192, 0.0
      %v195 = vld [vmem:[#allocation2] sm:$0xf]
      %197 = vrot.lane.b32.xlu0 %v195, 51
      %v198 = vpop.permute.xlu0 %197
      %v199 = vrot.slane %v198, 6
      %vm200 = vcmask 416768
      %v201 = vsel %vm200, %v199, %v198
      %vm203 = vcmask 1041816
      %vm204 = vmor %vm189, %vm203
      %vm205 = vcmask 414724
      %vm206 = vmor %vm205, %vm204
      %207 = vst.msk [vmem:[#allocation4] sm:$0x3f] %vm206, %v201
      %v208 = vld [vmem:[#allocation3] sm:$0xf]
      %210 = vrot.lane.b32.xlu0 %v208, 51
      %v211 = vpop.permute.xlu0 %210
      %v212 = vrot.slane %v211, 6
      %v213 = vsel %vm200, %v212, %v211
      %215 = vst.msk [vmem:[#allocation5] sm:$0x3f] %vm206, %v213
      %v216 = vld [vmem:[#allocation10] sm:$0x7f]
      %v217 = vld [vmem:[#allocation10 + $0x8] sm:$0x7f]
      %s218 = sld [smem:[#allocation6]]
      %s219 = sld [smem:[#allocation6 + $0x31]]
      %v220 = vld [vmem:[#allocation4] sm:$0xf]
      %v221 = vstv %s218
      %v222 = vmul.f32 %v221, %v220
      %v223 = vld [vmem:[#allocation5] sm:$0xf]
      %v224 = vstv %s219
      %v225 = vmul.f32 %v224, %v223
      %v226 = vadd.f32 %v222, %v225
      %s227 = sld [smem:[#allocation6 + $0x7]]
      %s228 = sld [smem:[#allocation6 + $0x38]]
      %v229 = vld [vmem:[#allocation4] sm:$0x3f]
      %v230 = vstv %s227
      %v231 = vmul.f32 %v230, %v229
      %v232 = vld [vmem:[#allocation5] sm:$0x3f]
      %v233 = vstv %s228
      %v234 = vmul.f32 %v233, %v232
      %v235 = vadd.f32 %v231, %v234
      %237 = vrot.lane.b32.xlu0 %v235, 112
      %v238 = vpop.permute.xlu0 %237
      %v239 = vrot.slane %v238, 2
      %vm240 = vcmask 916480
      %v241 = vsel %vm240, %v238, %v239
      %v243 = vadd.f32 %v226, %v241
      %s244 = sld [smem:[#allocation6 + $0xe]]
      %s245 = sld [smem:[#allocation6 + $0x3f]]
      %v246 = vstv %s244
      %v247 = vmul.f32 %v246, %v229
      %v248 = vstv %s245
      %v249 = vmul.f32 %v248, %v232
      %v250 = vadd.f32 %v247, %v249
      %252 = vrot.lane.b32.xlu0 %v250, 96
      %v253 = vpop.permute.xlu0 %252
      %v254 = vrot.slane %v253, 2
      %vm255 = vcmask 785408
      %v256 = vsel %vm255, %v253, %v254
      %v258 = vadd.f32 %v243, %v256
      %s259 = sld [smem:[#allocation6 + $0x15]]
      %s260 = sld [smem:[#allocation6 + $0x46]]
      %v261 = vstv %s259
      %v262 = vmul.f32 %v261, %v229
      %v263 = vstv %s260
      %v264 = vmul.f32 %v263, %v232
      %v265 = vadd.f32 %v262, %v264
      %267 = vrot.lane.b32.xlu0 %v265, 80
      %v268 = vpop.permute.xlu0 %267
      %v269 = vrot.slane %v268, 2
      %vm270 = vcmask 654336
      %v271 = vsel %vm270, %v268, %v269
      %v273 = vadd.f32 %v258, %v271
      %s274 = sld [smem:[#allocation6 + $0x1c]]
      %s275 = sld [smem:[#allocation6 + $0x4d]]
      %v276 = vstv %s274
      %v277 = vmul.f32 %v276, %v229
      %v278 = vstv %s275
      %v279 = vmul.f32 %v278, %v232
      %v280 = vadd.f32 %v277, %v279
      %282 = vrot.lane.b32.xlu0 %v280, 64
      %v283 = vpop.permute.xlu0 %282
      %v284 = vrot.slane %v283, 2
      %vm285 = vcmask 523264
      %v286 = vsel %vm285, %v283, %v284
      %v288 = vadd.f32 %v273, %v286
      %s289 = sld [smem:[#allocation6 + $0x23]]
      %s290 = sld [smem:[#allocation6 + $0x54]]
      %v291 = vstv %s289
      %v292 = vmul.f32 %v291, %v229
      %v293 = vstv %s290
      %v294 = vmul.f32 %v293, %v232
      %v295 = vadd.f32 %v292, %v294
      %297 = vrot.lane.b32.xlu0 %v295, 48
      %v298 = vpop.permute.xlu0 %297
      %v299 = vrot.slane %v298, 2
      %vm300 = vcmask 392192
      %v301 = vsel %vm300, %v298, %v299
      %v303 = vadd.f32 %v288, %v301
      %s304 = sld [smem:[#allocation6 + $0x2a]]
      %s305 = sld [smem:[#allocation6 + $0x5b]]
      %v306 = vstv %s304
      %v307 = vmul.f32 %v306, %v229
      %v308 = vstv %s305
      %v309 = vmul.f32 %v308, %v232
      %v310 = vadd.f32 %v307, %v309
      %312 = vrot.lane.b32.xlu0 %v310, 32
      %v313 = vpop.permute.xlu0 %312
      %v314 = vrot.slane %v313, 2
      %vm315 = vcmask 261120
      %v316 = vsel %vm315, %v313, %v314
      %v318 = vadd.f32 %v303, %v316
      %v319 = vperm.slane %v216, 0
      %v320 = vperm.slane %v217, 0
      %v323 = vrot.slane %v320, 6
      %v324 = vsel %vm188, %v319, %v323
      %v326 = vmul.f32 %v318, %v324
      %s327 = sld [smem:[#allocation6 + $0x1]]
      %s328 = sld [smem:[#allocation6 + $0x32]]
      %v329 = vstv %s327
      %v330 = vmul.f32 %v329, %v229
      %v331 = vstv %s328
      %v332 = vmul.f32 %v331, %v232
      %v333 = vadd.f32 %v330, %v332
      %s334 = sld [smem:[#allocation6 + $0x8]]
      %s335 = sld [smem:[#allocation6 + $0x39]]
      %v336 = vstv %s334
      %v337 = vmul.f32 %v336, %v229
      %v338 = vstv %s335
      %v339 = vmul.f32 %v338, %v232
      %v340 = vadd.f32 %v337, %v339
      %342 = vrot.lane.b32.xlu0 %v340, 112
      %v343 = vpop.permute.xlu0 %342
      %v344 = vrot.slane %v343, 2
      %v345 = vsel %vm240, %v343, %v344
      %v347 = vadd.f32 %v333, %v345
      %s348 = sld [smem:[#allocation6 + $0xf]]
      %s349 = sld [smem:[#allocation6 + $0x40]]
      %v350 = vstv %s348
      %v351 = vmul.f32 %v350, %v229
      %v352 = vstv %s349
      %v353 = vmul.f32 %v352, %v232
      %v354 = vadd.f32 %v351, %v353
      %356 = vrot.lane.b32.xlu0 %v354, 96
      %v357 = vpop.permute.xlu0 %356
      %v358 = vrot.slane %v357, 2
      %v359 = vsel %vm255, %v357, %v358
      %v361 = vadd.f32 %v347, %v359
      %s362 = sld [smem:[#allocation6 + $0x16]]
      %s363 = sld [smem:[#allocation6 + $0x47]]
      %v364 = vstv %s362
      %v365 = vmul.f32 %v364, %v229
      %v366 = vstv %s363
      %v367 = vmul.f32 %v366, %v232
      %v368 = vadd.f32 %v365, %v367
      %370 = vrot.lane.b32.xlu0 %v368, 80
      %v371 = vpop.permute.xlu0 %370
      %v372 = vrot.slane %v371, 2
      %v373 = vsel %vm270, %v371, %v372
      %v375 = vadd.f32 %v361, %v373
      %s376 = sld [smem:[#allocation6 + $0x1d]]
      %s377 = sld [smem:[#allocation6 + $0x4e]]
      %v378 = vstv %s376
      %v379 = vmul.f32 %v378, %v229
      %v380 = vstv %s377
      %v381 = vmul.f32 %v380, %v232
      %v382 = vadd.f32 %v379, %v381
      %384 = vrot.lane.b32.xlu0 %v382, 64
      %v385 = vpop.permute.xlu0 %384
      %v386 = vrot.slane %v385, 2
      %v387 = vsel %vm285, %v385, %v386
      %v389 = vadd.f32 %v375, %v387
      %s390 = sld [smem:[#allocation6 + $0x24]]
      %s391 = sld [smem:[#allocation6 + $0x55]]
      %v392 = vstv %s390
      %v393 = vmul.f32 %v392, %v229
      %v394 = vstv %s391
      %v395 = vmul.f32 %v394, %v232
      %v396 = vadd.f32 %v393, %v395
      %398 = vrot.lane.b32.xlu0 %v396, 48
      %v399 = vpop.permute.xlu0 %398
      %v400 = vrot.slane %v399, 2
      %v401 = vsel %vm300, %v399, %v400
      %v403 = vadd.f32 %v389, %v401
      %s404 = sld [smem:[#allocation6 + $0x2b]]
      %s405 = sld [smem:[#allocation6 + $0x5c]]
      %v406 = vstv %s404
      %v407 = vmul.f32 %v406, %v229
      %v408 = vstv %s405
      %v409 = vmul.f32 %v408, %v232
      %v410 = vadd.f32 %v407, %v409
      %412 = vrot.lane.b32.xlu0 %v410, 32
      %v413 = vpop.permute.xlu0 %412
      %v414 = vrot.slane %v413, 2
      %v415 = vsel %vm315, %v413, %v414
      %v417 = vadd.f32 %v403, %v415
      %v418 = vperm.slane %v216, 1
      %v419 = vperm.slane %v217, 1
      %v422 = vrot.slane %v419, 6
      %v423 = vsel %vm188, %v418, %v422
      %424 = vrot.lane.b32.xlu0 %v423, 1
      %v425 = vpop.permute.xlu0 %424
      %v426 = vrot.slane %v425, 6
      %vm427 = vcmask 7168
      %v428 = vsel %vm427, %v426, %v425
      %v430 = vmul.f32 %v417, %v428
      %432 = vrot.lane.b32.xlu0 %v430, 127
      %v433 = vpop.permute.xlu0 %432
      %v434 = vrot.slane %v433, 2
      %vm435 = vcmask 1039360
      %v436 = vsel %vm435, %v433, %v434
      %v438 = vadd.f32 %v326, %v436
      %s439 = sld [smem:[#allocation6 + $0x2]]
      %s440 = sld [smem:[#allocation6 + $0x33]]
      %v441 = vstv %s439
      %v442 = vmul.f32 %v441, %v229
      %v443 = vstv %s440
      %v444 = vmul.f32 %v443, %v232
      %v445 = vadd.f32 %v442, %v444
      %s446 = sld [smem:[#allocation6 + $0x9]]
      %s447 = sld [smem:[#allocation6 + $0x3a]]
      %v448 = vstv %s446
      %v449 = vmul.f32 %v448, %v229
      %v450 = vstv %s447
      %v451 = vmul.f32 %v450, %v232
      %v452 = vadd.f32 %v449, %v451
      %454 = vrot.lane.b32.xlu0 %v452, 112
      %v455 = vpop.permute.xlu0 %454
      %v456 = vrot.slane %v455, 2
      %v457 = vsel %vm240, %v455, %v456
      %v459 = vadd.f32 %v445, %v457
      %s460 = sld [smem:[#allocation6 + $0x10]]
      %s461 = sld [smem:[#allocation6 + $0x41]]
      %v462 = vstv %s460
      %v463 = vmul.f32 %v462, %v229
      %v464 = vstv %s461
      %v465 = vmul.f32 %v464, %v232
      %v466 = vadd.f32 %v463, %v465
      %468 = vrot.lane.b32.xlu0 %v466, 96
      %v469 = vpop.permute.xlu0 %468
      %v470 = vrot.slane %v469, 2
      %v471 = vsel %vm255, %v469, %v470
      %v473 = vadd.f32 %v459, %v471
      %s474 = sld [smem:[#allocation6 + $0x17]]
      %s475 = sld [smem:[#allocation6 + $0x48]]
      %v476 = vstv %s474
      %v477 = vmul.f32 %v476, %v229
      %v478 = vstv %s475
      %v479 = vmul.f32 %v478, %v232
      %v480 = vadd.f32 %v477, %v479
      %482 = vrot.lane.b32.xlu0 %v480, 80
      %v483 = vpop.permute.xlu0 %482
      %v484 = vrot.slane %v483, 2
      %v485 = vsel %vm270, %v483, %v484
      %v487 = vadd.f32 %v473, %v485
      %s488 = sld [smem:[#allocation6 + $0x1e]]
      %s489 = sld [smem:[#allocation6 + $0x4f]]
      %v490 = vstv %s488
      %v491 = vmul.f32 %v490, %v229
      %v492 = vstv %s489
      %v493 = vmul.f32 %v492, %v232
      %v494 = vadd.f32 %v491, %v493
      %496 = vrot.lane.b32.xlu0 %v494, 64
      %v497 = vpop.permute.xlu0 %496
      %v498 = vrot.slane %v497, 2
      %v499 = vsel %vm285, %v497, %v498
      %v501 = vadd.f32 %v487, %v499
      %s502 = sld [smem:[#allocation6 + $0x25]]
      %s503 = sld [smem:[#allocation6 + $0x56]]
      %v504 = vstv %s502
      %v505 = vmul.f32 %v504, %v229
      %v506 = vstv %s503
      %v507 = vmul.f32 %v506, %v232
      %v508 = vadd.f32 %v505, %v507
      %510 = vrot.lane.b32.xlu0 %v508, 48
      %v511 = vpop.permute.xlu0 %510
      %v512 = vrot.slane %v511, 2
      %v513 = vsel %vm300, %v511, %v512
      %v515 = vadd.f32 %v501, %v513
      %s516 = sld [smem:[#allocation6 + $0x2c]]
      %s517 = sld [smem:[#allocation6 + $0x5d]]
      %v518 = vstv %s516
      %v519 = vmul.f32 %v518, %v229
      %v520 = vstv %s517
      %v521 = vmul.f32 %v520, %v232
      %v522 = vadd.f32 %v519, %v521
      %524 = vrot.lane.b32.xlu0 %v522, 32
      %v525 = vpop.permute.xlu0 %524
      %v526 = vrot.slane %v525, 2
      %v527 = vsel %vm315, %v525, %v526
      %v529 = vadd.f32 %v515, %v527
      %v530 = vperm.slane %v216, 2
      %v531 = vperm.slane %v217, 2
      %v534 = vrot.slane %v531, 6
      %v535 = vsel %vm188, %v530, %v534
      %536 = vrot.lane.b32.xlu0 %v535, 2
      %v537 = vpop.permute.xlu0 %536
      %v538 = vrot.slane %v537, 6
      %vm539 = vcmask 15360
      %v540 = vsel %vm539, %v538, %v537
      %v542 = vmul.f32 %v529, %v540
      %544 = vrot.lane.b32.xlu0 %v542, 126
      %v545 = vpop.permute.xlu0 %544
      %v546 = vrot.slane %v545, 2
      %vm547 = vcmask 1031168
      %v548 = vsel %vm547, %v545, %v546
      %v550 = vadd.f32 %v438, %v548
      %s551 = sld [smem:[#allocation6 + $0x3]]
      %s552 = sld [smem:[#allocation6 + $0x34]]
      %v553 = vstv %s551
      %v554 = vmul.f32 %v553, %v229
      %v555 = vstv %s552
      %v556 = vmul.f32 %v555, %v232
      %v557 = vadd.f32 %v554, %v556
      %s558 = sld [smem:[#allocation6 + $0xa]]
      %s559 = sld [smem:[#allocation6 + $0x3b]]
      %v560 = vstv %s558
      %v561 = vmul.f32 %v560, %v229
      %v562 = vstv %s559
      %v563 = vmul.f32 %v562, %v232
      %v564 = vadd.f32 %v561, %v563
      %566 = vrot.lane.b32.xlu0 %v564, 112
      %v567 = vpop.permute.xlu0 %566
      %v568 = vrot.slane %v567, 2
      %v569 = vsel %vm240, %v567, %v568
      %v571 = vadd.f32 %v557, %v569
      %s572 = sld [smem:[#allocation6 + $0x11]]
      %s573 = sld [smem:[#allocation6 + $0x42]]
      %v574 = vstv %s572
      %v575 = vmul.f32 %v574, %v229
      %v576 = vstv %s573
      %v577 = vmul.f32 %v576, %v232
      %v578 = vadd.f32 %v575, %v577
      %580 = vrot.lane.b32.xlu0 %v578, 96
      %v581 = vpop.permute.xlu0 %580
      %v582 = vrot.slane %v581, 2
      %v583 = vsel %vm255, %v581, %v582
      %v585 = vadd.f32 %v571, %v583
      %s586 = sld [smem:[#allocation6 + $0x18]]
      %s587 = sld [smem:[#allocation6 + $0x49]]
      %v588 = vstv %s586
      %v589 = vmul.f32 %v588, %v229
      %v590 = vstv %s587
      %v591 = vmul.f32 %v590, %v232
      %v592 = vadd.f32 %v589, %v591
      %594 = vrot.lane.b32.xlu0 %v592, 80
      %v595 = vpop.permute.xlu0 %594
      %v596 = vrot.slane %v595, 2
      %v597 = vsel %vm270, %v595, %v596
      %v599 = vadd.f32 %v585, %v597
      %s600 = sld [smem:[#allocation6 + $0x1f]]
      %s601 = sld [smem:[#allocation6 + $0x50]]
      %v602 = vstv %s600
      %v603 = vmul.f32 %v602, %v229
      %v604 = vstv %s601
      %v605 = vmul.f32 %v604, %v232
      %v606 = vadd.f32 %v603, %v605
      %608 = vrot.lane.b32.xlu0 %v606, 64
      %v609 = vpop.permute.xlu0 %608
      %v610 = vrot.slane %v609, 2
      %v611 = vsel %vm285, %v609, %v610
      %v613 = vadd.f32 %v599, %v611
      %s614 = sld [smem:[#allocation6 + $0x26]]
      %s615 = sld [smem:[#allocation6 + $0x57]]
      %v616 = vstv %s614
      %v617 = vmul.f32 %v616, %v229
      %v618 = vstv %s615
      %v619 = vmul.f32 %v618, %v232
      %v620 = vadd.f32 %v617, %v619
      %622 = vrot.lane.b32.xlu0 %v620, 48
      %v623 = vpop.permute.xlu0 %622
      %v624 = vrot.slane %v623, 2
      %v625 = vsel %vm300, %v623, %v624
      %v627 = vadd.f32 %v613, %v625
      %s628 = sld [smem:[#allocation6 + $0x2d]]
      %s629 = sld [smem:[#allocation6 + $0x5e]]
      %v630 = vstv %s628
      %v631 = vmul.f32 %v630, %v229
      %v632 = vstv %s629
      %v633 = vmul.f32 %v632, %v232
      %v634 = vadd.f32 %v631, %v633
      %636 = vrot.lane.b32.xlu0 %v634, 32
      %v637 = vpop.permute.xlu0 %636
      %v638 = vrot.slane %v637, 2
      %v639 = vsel %vm315, %v637, %v638
      %v641 = vadd.f32 %v627, %v639
      %643 = vrot.lane.b32.xlu0 %v641, 125
      %v644 = vpop.permute.xlu0 %643
      %v645 = vrot.slane %v644, 2
      %vm646 = vcmask 1022976
      %v647 = vsel %vm646, %v644, %v645
      %v649 = vadd.f32 %v550, %v647
      %s650 = sld [smem:[#allocation6 + $0x4]]
      %s651 = sld [smem:[#allocation6 + $0x35]]
      %v652 = vstv %s650
      %v653 = vmul.f32 %v652, %v229
      %v654 = vstv %s651
      %v655 = vmul.f32 %v654, %v232
      %v656 = vadd.f32 %v653, %v655
      %s657 = sld [smem:[#allocation6 + $0xb]]
      %s658 = sld [smem:[#allocation6 + $0x3c]]
      %v659 = vstv %s657
      %v660 = vmul.f32 %v659, %v229
      %v661 = vstv %s658
      %v662 = vmul.f32 %v661, %v232
      %v663 = vadd.f32 %v660, %v662
      %665 = vrot.lane.b32.xlu0 %v663, 112
      %v666 = vpop.permute.xlu0 %665
      %v667 = vrot.slane %v666, 2
      %v668 = vsel %vm240, %v666, %v667
      %v670 = vadd.f32 %v656, %v668
      %s671 = sld [smem:[#allocation6 + $0x12]]
      %s672 = sld [smem:[#allocation6 + $0x43]]
      %v673 = vstv %s671
      %v674 = vmul.f32 %v673, %v229
      %v675 = vstv %s672
      %v676 = vmul.f32 %v675, %v232
      %v677 = vadd.f32 %v674, %v676
      %679 = vrot.lane.b32.xlu0 %v677, 96
      %v680 = vpop.permute.xlu0 %679
      %v681 = vrot.slane %v680, 2
      %v682 = vsel %vm255, %v680, %v681
      %v684 = vadd.f32 %v670, %v682
      %s685 = sld [smem:[#allocation6 + $0x19]]
      %s686 = sld [smem:[#allocation6 + $0x4a]]
      %v687 = vstv %s685
      %v688 = vmul.f32 %v687, %v229
      %v689 = vstv %s686
      %v690 = vmul.f32 %v689, %v232
      %v691 = vadd.f32 %v688, %v690
      %693 = vrot.lane.b32.xlu0 %v691, 80
      %v694 = vpop.permute.xlu0 %693
      %v695 = vrot.slane %v694, 2
      %v696 = vsel %vm270, %v694, %v695
      %v698 = vadd.f32 %v684, %v696
      %s699 = sld [smem:[#allocation6 + $0x20]]
      %s700 = sld [smem:[#allocation6 + $0x51]]
      %v701 = vstv %s699
      %v702 = vmul.f32 %v701, %v229
      %v703 = vstv %s700
      %v704 = vmul.f32 %v703, %v232
      %v705 = vadd.f32 %v702, %v704
      %707 = vrot.lane.b32.xlu0 %v705, 64
      %v708 = vpop.permute.xlu0 %707
      %v709 = vrot.slane %v708, 2
      %v710 = vsel %vm285, %v708, %v709
      %v712 = vadd.f32 %v698, %v710
      %s713 = sld [smem:[#allocation6 + $0x27]]
      %s714 = sld [smem:[#allocation6 + $0x58]]
      %v715 = vstv %s713
      %v716 = vmul.f32 %v715, %v229
      %v717 = vstv %s714
      %v718 = vmul.f32 %v717, %v232
      %v719 = vadd.f32 %v716, %v718
      %721 = vrot.lane.b32.xlu0 %v719, 48
      %v722 = vpop.permute.xlu0 %721
      %v723 = vrot.slane %v722, 2
      %v724 = vsel %vm300, %v722, %v723
      %v726 = vadd.f32 %v712, %v724
      %s727 = sld [smem:[#allocation6 + $0x2e]]
      %s728 = sld [smem:[#allocation6 + $0x5f]]
      %v729 = vstv %s727
      %v730 = vmul.f32 %v729, %v229
      %v731 = vstv %s728
      %v732 = vmul.f32 %v731, %v232
      %v733 = vadd.f32 %v730, %v732
      %735 = vrot.lane.b32.xlu0 %v733, 32
      %v736 = vpop.permute.xlu0 %735
      %v737 = vrot.slane %v736, 2
      %v738 = vsel %vm315, %v736, %v737
      %v740 = vadd.f32 %v726, %v738
      %v741 = vperm.slane %v216, 4
      %v742 = vperm.slane %v217, 4
      %v745 = vrot.slane %v742, 6
      %v746 = vsel %vm188, %v741, %v745
      %747 = vrot.lane.b32.xlu0 %v746, 4
      %v748 = vpop.permute.xlu0 %747
      %v749 = vrot.slane %v748, 6
      %vm750 = vcmask 31744
      %v751 = vsel %vm750, %v749, %v748
      %v753 = vmul.f32 %v740, %v751
      %755 = vrot.lane.b32.xlu0 %v753, 124
      %v756 = vpop.permute.xlu0 %755
      %v757 = vrot.slane %v756, 2
      %vm758 = vcmask 1014784
      %v759 = vsel %vm758, %v756, %v757
      %v761 = vadd.f32 %v649, %v759
      %s762 = sld [smem:[#allocation6 + $0x5]]
      %s763 = sld [smem:[#allocation6 + $0x36]]
      %v764 = vstv %s762
      %v765 = vmul.f32 %v764, %v229
      %v766 = vstv %s763
      %v767 = vmul.f32 %v766, %v232
      %v768 = vadd.f32 %v765, %v767
      %s769 = sld [smem:[#allocation6 + $0xc]]
      %s770 = sld [smem:[#allocation6 + $0x3d]]
      %v771 = vstv %s769
      %v772 = vmul.f32 %v771, %v229
      %v773 = vstv %s770
      %v774 = vmul.f32 %v773, %v232
      %v775 = vadd.f32 %v772, %v774
      %777 = vrot.lane.b32.xlu0 %v775, 112
      %v778 = vpop.permute.xlu0 %777
      %v779 = vrot.slane %v778, 2
      %v780 = vsel %vm240, %v778, %v779
      %v782 = vadd.f32 %v768, %v780
      %s783 = sld [smem:[#allocation6 + $0x13]]
      %s784 = sld [smem:[#allocation6 + $0x44]]
      %v785 = vstv %s783
      %v786 = vmul.f32 %v785, %v229
      %v787 = vstv %s784
      %v788 = vmul.f32 %v787, %v232
      %v789 = vadd.f32 %v786, %v788
      %791 = vrot.lane.b32.xlu0 %v789, 96
      %v792 = vpop.permute.xlu0 %791
      %v793 = vrot.slane %v792, 2
      %v794 = vsel %vm255, %v792, %v793
      %v796 = vadd.f32 %v782, %v794
      %s797 = sld [smem:[#allocation6 + $0x1a]]
      %s798 = sld [smem:[#allocation6 + $0x4b]]
      %v799 = vstv %s797
      %v800 = vmul.f32 %v799, %v229
      %v801 = vstv %s798
      %v802 = vmul.f32 %v801, %v232
      %v803 = vadd.f32 %v800, %v802
      %805 = vrot.lane.b32.xlu0 %v803, 80
      %v806 = vpop.permute.xlu0 %805
      %v807 = vrot.slane %v806, 2
      %v808 = vsel %vm270, %v806, %v807
      %v810 = vadd.f32 %v796, %v808
      %s811 = sld [smem:[#allocation6 + $0x21]]
      %s812 = sld [smem:[#allocation6 + $0x52]]
      %v813 = vstv %s811
      %v814 = vmul.f32 %v813, %v229
      %v815 = vstv %s812
      %v816 = vmul.f32 %v815, %v232
      %v817 = vadd.f32 %v814, %v816
      %819 = vrot.lane.b32.xlu0 %v817, 64
      %v820 = vpop.permute.xlu0 %819
      %v821 = vrot.slane %v820, 2
      %v822 = vsel %vm285, %v820, %v821
      %v824 = vadd.f32 %v810, %v822
      %s825 = sld [smem:[#allocation6 + $0x28]]
      %s826 = sld [smem:[#allocation6 + $0x59]]
      %v827 = vstv %s825
      %v828 = vmul.f32 %v827, %v229
      %v829 = vstv %s826
      %v830 = vmul.f32 %v829, %v232
      %v831 = vadd.f32 %v828, %v830
      %833 = vrot.lane.b32.xlu0 %v831, 48
      %v834 = vpop.permute.xlu0 %833
      %v835 = vrot.slane %v834, 2
      %v836 = vsel %vm300, %v834, %v835
      %v838 = vadd.f32 %v824, %v836
      %s839 = sld [smem:[#allocation6 + $0x2f]]
      %s840 = sld [smem:[#allocation6 + $0x60]]
      %v841 = vstv %s839
      %v842 = vmul.f32 %v841, %v229
      %v843 = vstv %s840
      %v844 = vmul.f32 %v843, %v232
      %v845 = vadd.f32 %v842, %v844
      %847 = vrot.lane.b32.xlu0 %v845, 32
      %v848 = vpop.permute.xlu0 %847
      %v849 = vrot.slane %v848, 2
      %v850 = vsel %vm315, %v848, %v849
      %v852 = vadd.f32 %v838, %v850
      %v853 = vperm.slane %v216, 5
      %v854 = vperm.slane %v217, 5
      %v857 = vrot.slane %v854, 6
      %v858 = vsel %vm188, %v853, %v857
      %859 = vrot.lane.b32.xlu0 %v858, 5
      %v860 = vpop.permute.xlu0 %859
      %v861 = vrot.slane %v860, 6
      %vm862 = vcmask 39936
      %v863 = vsel %vm862, %v861, %v860
      %v865 = vmul.f32 %v852, %v863
      %867 = vrot.lane.b32.xlu0 %v865, 123
      %v868 = vpop.permute.xlu0 %867
      %v869 = vrot.slane %v868, 2
      %vm870 = vcmask 1006592
      %v871 = vsel %vm870, %v868, %v869
      %v873 = vadd.f32 %v761, %v871
      %s874 = sld [smem:[#allocation6 + $0x6]]
      %s875 = sld [smem:[#allocation6 + $0x37]]
      %v876 = vstv %s874
      %v877 = vmul.f32 %v876, %v229
      %v878 = vstv %s875
      %v879 = vmul.f32 %v878, %v232
      %v880 = vadd.f32 %v877, %v879
      %s881 = sld [smem:[#allocation6 + $0xd]]
      %s882 = sld [smem:[#allocation6 + $0x3e]]
      %v883 = vstv %s881
      %v884 = vmul.f32 %v883, %v229
      %v885 = vstv %s882
      %v886 = vmul.f32 %v885, %v232
      %v887 = vadd.f32 %v884, %v886
      %889 = vrot.lane.b32.xlu0 %v887, 112
      %v890 = vpop.permute.xlu0 %889
      %v891 = vrot.slane %v890, 2
      %v892 = vsel %vm240, %v890, %v891
      %v894 = vadd.f32 %v880, %v892
      %s895 = sld [smem:[#allocation6 + $0x14]]
      %s896 = sld [smem:[#allocation6 + $0x45]]
      %v897 = vstv %s895
      %v898 = vmul.f32 %v897, %v229
      %v899 = vstv %s896
      %v900 = vmul.f32 %v899, %v232
      %v901 = vadd.f32 %v898, %v900
      %903 = vrot.lane.b32.xlu0 %v901, 96
      %v904 = vpop.permute.xlu0 %903
      %v905 = vrot.slane %v904, 2
      %v906 = vsel %vm255, %v904, %v905
      %v908 = vadd.f32 %v894, %v906
      %s909 = sld [smem:[#allocation6 + $0x1b]]
      %s910 = sld [smem:[#allocation6 + $0x4c]]
      %v911 = vstv %s909
      %v912 = vmul.f32 %v911, %v229
      %v913 = vstv %s910
      %v914 = vmul.f32 %v913, %v232
      %v915 = vadd.f32 %v912, %v914
      %917 = vrot.lane.b32.xlu0 %v915, 80
      %v918 = vpop.permute.xlu0 %917
      %v919 = vrot.slane %v918, 2
      %v920 = vsel %vm270, %v918, %v919
      %v922 = vadd.f32 %v908, %v920
      %s923 = sld [smem:[#allocation6 + $0x22]]
      %s924 = sld [smem:[#allocation6 + $0x53]]
      %v925 = vstv %s923
      %v926 = vmul.f32 %v925, %v229
      %v927 = vstv %s924
      %v928 = vmul.f32 %v927, %v232
      %v929 = vadd.f32 %v926, %v928
      %931 = vrot.lane.b32.xlu0 %v929, 64
      %v932 = vpop.permute.xlu0 %931
      %v933 = vrot.slane %v932, 2
      %v934 = vsel %vm285, %v932, %v933
      %v936 = vadd.f32 %v922, %v934
      %s937 = sld [smem:[#allocation6 + $0x29]]
      %s938 = sld [smem:[#allocation6 + $0x5a]]
      %v939 = vstv %s937
      %v940 = vmul.f32 %v939, %v229
      %v941 = vstv %s938
      %v942 = vmul.f32 %v941, %v232
      %v943 = vadd.f32 %v940, %v942
      %945 = vrot.lane.b32.xlu0 %v943, 48
      %v946 = vpop.permute.xlu0 %945
      %v947 = vrot.slane %v946, 2
      %v948 = vsel %vm300, %v946, %v947
      %v950 = vadd.f32 %v936, %v948
      %s951 = sld [smem:[#allocation6 + $0x30]]
      %s952 = sld [smem:[#allocation6 + $0x61]]
      %v953 = vstv %s951
      %v954 = vmul.f32 %v953, %v229
      %v955 = vstv %s952
      %v956 = vmul.f32 %v955, %v232
      %v957 = vadd.f32 %v954, %v956
      %959 = vrot.lane.b32.xlu0 %v957, 32
      %v960 = vpop.permute.xlu0 %959
      %v961 = vrot.slane %v960, 2
      %v962 = vsel %vm315, %v960, %v961
      %v964 = vadd.f32 %v950, %v962
      %v965 = vperm.slane %v216, 6
      %v966 = vperm.slane %v217, 6
      %v969 = vrot.slane %v966, 6
      %v970 = vsel %vm188, %v965, %v969
      %971 = vrot.lane.b32.xlu0 %v970, 6
      %v972 = vpop.permute.xlu0 %971
      %v973 = vrot.slane %v972, 6
      %vm974 = vcmask 48128
      %v975 = vsel %vm974, %v973, %v972
      %v977 = vmul.f32 %v964, %v975
      %979 = vrot.lane.b32.xlu0 %v977, 122
      %v980 = vpop.permute.xlu0 %979
      %v981 = vrot.slane %v980, 2
      %vm982 = vcmask 998400
      %v983 = vsel %vm982, %v980, %v981
      %v985 = vadd.f32 %v873, %v983
      %v986 = vxor.u32 %v985, 2147483648
      %v987 = vmul.f32 %v986, 1.442695
      %v988 = vpow.pop %v987
      %v989 = vadd.f32 %v988, 1.0
      %v990 = vrcp.pop %v989
      %v991 = vmul.f32 %v989, %v990
      %v992 = vsub.f32 1.0, %v991
      %v993 = vmul.f32 %v990, %v992
      %v994 = vadd.f32 %v990, %v993
      %vm995 = vweird.f32 %v989
      %vm996 = vweird.f32 %v990
      %vm997 = vmor %vm995, %vm996
      %v998 = vsel %vm997, %v990, %v994
      %v999 = vand.u32 2147483647, %v989
      %vm1000 = vcmp.eq.f32.partialorder %v999, 8.507059e+37
      %v1001 = vand.u32 %v989, 2147483648
      %v1002 = vor.u32 1.1754944e-38, %v1001
      %v1003 = vsel %vm1000, %v1002, %v998
      %v1004 = vmul.f32 1.0, %v1003
      %v1006 = vrot.slane %v1004, 1
      %v1007 = vrot.slane %v1004, 2
      %v1008 = vrot.slane %v1004, 3
      %v1009 = vsel %vm109, %v1004, %v1006
      %vm1010 = vcmask 1042434
      %v1011 = vsel %vm1010, %v1007, %v1008
      %v1012 = vsel %vm188, %v1009, %v1011
      %vm1013 = vcmask 1041409
      %v1014 = vsel %vm1013, %v1004, %v1006
      %vm1015 = vcmask 1043459
      %v1016 = vsel %vm1015, %v1007, %v1008
      %vm1017 = vcmask 1042433
      %v1018 = vsel %vm1017, %v1014, %v1016
      %v1019 = vrot.slane %v1018, 1
      %1022 = vst.msk [vmem:[#allocation13] sm:$0x3] %vm116, %v1012
      %1023 = vst.msk [vmem:[#allocation13 + $0x2] sm:$0x3] %vm116, %v1019
    $region33: #{tpu_custom_call.1} parent=1 // pred_fallthru
      _
    // Predicated region
    $region34: #{tpu_custom_call.1} parent=1 // pred_check
      _
    $region35: #{tpu_custom_call.1} parent=1 // pred_check_branch
      %1025 = sbr.rel (0) target = $region37
    $region36: #{tpu_custom_call.1} parent=1 // pred_region
      %1027 = vsyncadd [#allocation8], 0
      %s1028 = sshll.u32 [#allocation13], 4
      %s1029 = int_to_ptr.vmem [resolvable:$true] %s1028
      %s1030 = sshll.u32 %s3, 4
      %s1031 = int_to_ptr.hbm [resolvable:$true] %s1030
      %1036 = dma.vmem_to_hbm [thread:$0]  %s1029, 64, %s1031, [#allocation8], 32, 32, 2
    $region37: #{tpu_custom_call.1} parent=1 // pred_fallthru
      _
    // Predicated region
    $region38: #{tpu_custom_call.1} parent=1 // pred_check
      _
    $region39: #{tpu_custom_call.1} parent=1 // pred_check_branch
      %1038 = sbr.rel (0) target = $region41
    $region40: #{tpu_custom_call.1} parent=1 // pred_region
      %1040 = dma.done [#allocation8], 64
    $region41: #{tpu_custom_call.1} parent=1 // pred_fallthru
      _
    %1041 = vsyncpa [#allocation7], 1
    %1042 = vsyncpa [#allocation12], 1
    %1043 = vsyncpa [#allocation8], 1
    %1044 = vsyncpa [#allocation9], 1

</llo_original>
